<compile_context>
chip_gen: v7x
topology: tpu7x:2x2x1
jax: 0.10.0
libtpu: 0.0.40
codegen_flags: <defaults>
</compile_context>

<pallas_src>
import jax
import jax.numpy as jnp
from jax.experimental import pallas as pl
from jax.experimental.pallas import tpu as pltpu


def gru_rnn_kernel(x_ref, h0_ref, wih_ref, whh_ref, bih_ref, bhhn_ref,
                   wdec_ref, bdec_ref,
                   out_ref, hout_ref,
                   gru_out_ref):
    """Single-invocation kernel: full GRU recurrence + decoder matmul.

    All gate blocks are padded to HP=128 lanes; gate g lives at lanes
    [g*HP, (g+1)*HP) of the fused 3*HP axis (gate order r|z|n).

    x_ref      : (S, I)       input sequence
    h0_ref     : (1, HP)      initial hidden state (zero-padded H->HP)
    wih_ref    : (I, 3*HP)    GRU input weights  (transposed, lane-padded)
    whh_ref    : (HP, 3*HP)   GRU hidden weights (transposed, lane-padded)
    bih_ref    : (1, 3*HP)    input bias with r/z hidden biases folded in
    bhhn_ref   : (1, HP)      n-gate hidden bias only
    wdec_ref   : (HP, OP)     decoder weight (transposed, padded)
    bdec_ref   : (1, OP)      decoder bias (padded)
    out_ref    : (S, OP)      decoder output (lane-dense, padded)
    hout_ref   : (1, HP)      final hidden state (padded)
    gru_out_ref: (S, HP)      scratch: per-timestep hidden states
    """
    HP = h0_ref.shape[1]
    S = x_ref.shape[0]

    # Input projection for every timestep in one MXU matmul (off the serial
    # critical path); r/z hidden biases are already folded into bih.
    xproj = (
        jnp.dot(x_ref[...], wih_ref[...], preferred_element_type=jnp.float32)
        + bih_ref[...]
    )                                                             # (S, 3*HP)

    whh = whh_ref[...]                                            # (HP, 3*HP)
    bhh_n = bhhn_ref[...]                                         # (1, HP)

    h = h0_ref[...]                                               # (1, HP)
    # S is a compile-time constant: fully unrolled recurrence, all slices
    # static and lane-aligned (gate blocks at offsets 0 / HP / 2*HP).
    for t in range(S):
        xp = xproj[t:t + 1, :]                                    # (1, 3*HP)
        hp = jnp.dot(h, whh, preferred_element_type=jnp.float32)  # (1, 3*HP)
        r = jax.nn.sigmoid(xp[:, 0:HP] + hp[:, 0:HP])
        z = jax.nn.sigmoid(xp[:, HP:2 * HP] + hp[:, HP:2 * HP])
        n = jnp.tanh(xp[:, 2 * HP:3 * HP]
                     + r * (hp[:, 2 * HP:3 * HP] + bhh_n))
        h = (1.0 - z) * n + z * h
        gru_out_ref[pl.ds(t, 1), :] = h

    hout_ref[...] = h

    # Decoder: one MXU matmul over the whole sequence, lane-dense output.
    out_ref[...] = (
        jnp.dot(gru_out_ref[...], wdec_ref[...],
                preferred_element_type=jnp.float32)
        + bdec_ref[...]
    )


@jax.jit
def gru_rnn_forward(x, hidden, params):
    """JAX wrapper matching GruRNN.forward(x, hidden) -> (output, hidden)."""
    S, I = x.shape
    H = hidden.shape[-1]
    O = params["w_dec"].shape[0]
    HP = 128        # per-gate lane-padded width
    OP = 128        # lane-dense decoder output width

    w_ih = params["w_ih"]           # (3H, I)  gates r|z|n
    w_hh = params["w_hh"]           # (3H, H)
    b_ih = params["b_ih"]           # (3H,)
    b_hh = params["b_hh"]           # (3H,)

    def split_gates(a):
        return a[0:H], a[H:2 * H], a[2 * H:3 * H]

    wih_r, wih_z, wih_n = split_gates(w_ih)
    whh_r, whh_z, whh_n = split_gates(w_hh)
    bih_r, bih_z, bih_n = split_gates(b_ih)
    bhh_r, bhh_z, bhh_n = split_gates(b_hh)

    # Fold r/z hidden biases into the (precomputed) input projection bias.
    bi_r = bih_r + bhh_r
    bi_z = bih_z + bhh_z
    bi_n = bih_n                    # n-gate hidden bias stays inside r*(...)

    def pad_ih_gate(w):             # (H, I) -> (I, HP)
        return jnp.pad(w.T, ((0, 0), (0, HP - H)))

    def pad_hh_gate(w):             # (H, H) -> (HP, HP)
        return jnp.pad(w.T, ((0, HP - H), (0, HP - H)))

    def pad_vec(b):                 # (H,) -> (1, HP)
        return jnp.pad(b, (0, HP - H))[None, :]

    wih_p = jnp.concatenate(
        [pad_ih_gate(wih_r), pad_ih_gate(wih_z), pad_ih_gate(wih_n)], axis=1)
    whh_p = jnp.concatenate(
        [pad_hh_gate(whh_r), pad_hh_gate(whh_z), pad_hh_gate(whh_n)], axis=1)
    bih_p = jnp.concatenate([pad_vec(bi_r), pad_vec(bi_z), pad_vec(bi_n)],
                            axis=1)                               # (1, 3*HP)
    bhhn_p = pad_vec(bhh_n)                                       # (1, HP)

    wdec_p = jnp.pad(params["w_dec"].T, ((0, HP - H), (0, OP - O)))  # (HP, OP)
    bdec_p = jnp.pad(params["b_dec"], (0, OP - O))[None, :]          # (1, OP)

    h0_p = jnp.pad(hidden.reshape(1, H), ((0, 0), (0, HP - H)))      # (1, HP)

    vmem = lambda: pl.BlockSpec(memory_space=pltpu.MemorySpace.VMEM)
    out_p, hout_p = pl.pallas_call(
        gru_rnn_kernel,
        out_shape=(
            jax.ShapeDtypeStruct((S, OP), jnp.float32),
            jax.ShapeDtypeStruct((1, HP), jnp.float32),
        ),
        in_specs=[vmem() for _ in range(8)],
        out_specs=(vmem(), vmem()),
        scratch_shapes=[pltpu.VMEM((S, HP), jnp.float32)],
    )(x, h0_p, wih_p, whh_p, bih_p, bhhn_p, wdec_p, bdec_p)

    return out_p[:, :O], hout_p[:, :H]


def init_params(key, input_size, hidden_size, output_size):
    """Deterministic init mimicking PyTorch's U(-1/sqrt(H), 1/sqrt(H))."""
    ks = jax.random.split(key, 6)
    bound = 1.0 / jnp.sqrt(hidden_size)
    u = lambda k, shape: jax.random.uniform(
        k, shape, jnp.float32, minval=-bound, maxval=bound)
    return {
        "w_ih": u(ks[0], (3 * hidden_size, input_size)),   # gates r|z|n
        "w_hh": u(ks[1], (3 * hidden_size, hidden_size)),
        "b_ih": u(ks[2], (3 * hidden_size,)),
        "b_hh": u(ks[3], (3 * hidden_size,)),
        "w_dec": u(ks[4], (output_size, hidden_size)),
        "b_dec": u(ks[5], (output_size,)),
    }


def gru_rnn_reference(x, hidden, params):
    """Pure-JAX reference of the same forward pass (for validation)."""
    H = hidden.shape[-1]
    h = hidden.reshape(1, H)
    xp_all = x @ params["w_ih"].T + params["b_ih"]

    def step(h, xp):
        xp = xp[None, :]
        hp = h @ params["w_hh"].T + params["b_hh"]
        r = jax.nn.sigmoid(xp[:, 0:H] + hp[:, 0:H])
        z = jax.nn.sigmoid(xp[:, H:2 * H] + hp[:, H:2 * H])
        n = jnp.tanh(xp[:, 2 * H:3 * H] + r * hp[:, 2 * H:3 * H])
        h_new = (1.0 - z) * n + z * h
        return h_new, h_new[0]

    h_final, hs = jax.lax.scan(step, h, xp_all)
    out = hs @ params["w_dec"].T + params["b_dec"]
    return out, h_final


if __name__ == "__main__":
    # Small, forward-consistent shapes: seq=8 chars, input_size=hidden_size=32,
    # output_size=10 ('<nop>','<cap>' + 8 punctuation chars).
    SEQ, INPUT_SIZE, HIDDEN_SIZE, OUTPUT_SIZE = 8, 32, 32, 10

    key = jax.random.PRNGKey(0)
    k_x, k_p = jax.random.split(key)

    x = jax.random.normal(k_x, (SEQ, INPUT_SIZE), jnp.float32)
    hidden = jnp.zeros((1, HIDDEN_SIZE), jnp.float32)   # GruRNN.init_hidden()
    params = init_params(k_p, INPUT_SIZE, HIDDEN_SIZE, OUTPUT_SIZE)

    out, h_final = gru_rnn_forward(x, hidden, params)
    out, h_final = jax.block_until_ready((out, h_final))

    ref_out, ref_h = gru_rnn_reference(x, hidden, params)
    assert out.shape == (SEQ, OUTPUT_SIZE) and h_final.shape == (1, HIDDEN_SIZE)
    assert jnp.allclose(out, ref_out, atol=1e-5, rtol=1e-5)
    assert jnp.allclose(h_final, ref_h, atol=1e-5, rtol=1e-5)

    print("KERNEL_OK")
</pallas_src>

<mosaic_0001>
module attributes {stable_mosaic.version = 11 : i64} {
  func.func @gru_rnn_kernel(%arg0: memref<8x32xf32, #tpu.memory_space<vmem>>, %arg1: memref<1x128xf32, #tpu.memory_space<vmem>>, %arg2: memref<32x384xf32, #tpu.memory_space<vmem>>, %arg3: memref<128x384xf32, #tpu.memory_space<vmem>>, %arg4: memref<1x384xf32, #tpu.memory_space<vmem>>, %arg5: memref<1x128xf32, #tpu.memory_space<vmem>>, %arg6: memref<128x128xf32, #tpu.memory_space<vmem>>, %arg7: memref<1x128xf32, #tpu.memory_space<vmem>>, %arg8: memref<8x128xf32, #tpu.memory_space<vmem>>, %arg9: memref<1x128xf32, #tpu.memory_space<vmem>>, %arg10: memref<8x128xf32, #tpu.memory_space<vmem>>) attributes {dimension_semantics = [], scalar_prefetch = 0 : i64, scratch_operands = 1 : i64, tpu.core_type = #tpu.core_type<tc>} {
    %c0 = arith.constant 0 : index
    %c0_0 = arith.constant 0 : index
    %0 = vector.load %arg0[%c0, %c0_0] : memref<8x32xf32, #tpu.memory_space<vmem>>, vector<8x32xf32>
    %c0_1 = arith.constant 0 : index
    %c0_2 = arith.constant 0 : index
    %1 = vector.load %arg2[%c0_1, %c0_2] : memref<32x384xf32, #tpu.memory_space<vmem>>, vector<32x384xf32>
    %cst = arith.constant dense<0.000000e+00> : vector<8x384xf32>
    %2 = tpu.matmul %0, %1, %cst {dimension_numbers = #tpu.dot_dimension_numbers<[1], [0], [0], [1], [0, 0, 1, 1], [], []>} : vector<8x32xf32>, vector<32x384xf32>, vector<8x384xf32> -> vector<8x384xf32>
    %c0_3 = arith.constant 0 : index
    %c0_4 = arith.constant 0 : index
    %3 = vector.load %arg4[%c0_3, %c0_4] : memref<1x384xf32, #tpu.memory_space<vmem>>, vector<1x384xf32>
    %4 = vector.broadcast %3 : vector<1x384xf32> to vector<8x384xf32>
    %5 = arith.addf %2, %4 : vector<8x384xf32>
    %c0_5 = arith.constant 0 : index
    %c0_6 = arith.constant 0 : index
    %6 = vector.load %arg3[%c0_5, %c0_6] : memref<128x384xf32, #tpu.memory_space<vmem>>, vector<128x384xf32>
    %c0_7 = arith.constant 0 : index
    %c0_8 = arith.constant 0 : index
    %7 = vector.load %arg5[%c0_7, %c0_8] : memref<1x128xf32, #tpu.memory_space<vmem>>, vector<1x128xf32>
    %c0_9 = arith.constant 0 : index
    %c0_10 = arith.constant 0 : index
    %8 = vector.load %arg1[%c0_9, %c0_10] : memref<1x128xf32, #tpu.memory_space<vmem>>, vector<1x128xf32>
    %9 = vector.extract_strided_slice %5 {offsets = [0, 0], sizes = [1, 384], strides = [1, 1]} : vector<8x384xf32> to vector<1x384xf32>
    %cst_11 = arith.constant dense<0.000000e+00> : vector<1x384xf32>
    %10 = tpu.matmul %8, %6, %cst_11 {dimension_numbers = #tpu.dot_dimension_numbers<[1], [0], [0], [1], [0, 0, 1, 1], [], []>} : vector<1x128xf32>, vector<128x384xf32>, vector<1x384xf32> -> vector<1x384xf32>
    %11 = vector.extract_strided_slice %9 {offsets = [0, 0], sizes = [1, 128], strides = [1, 1]} : vector<1x384xf32> to vector<1x128xf32>
    %12 = vector.extract_strided_slice %10 {offsets = [0, 0], sizes = [1, 128], strides = [1, 1]} : vector<1x384xf32> to vector<1x128xf32>
    %13 = arith.addf %11, %12 : vector<1x128xf32>
    %14 = arith.negf %13 : vector<1x128xf32>
    %15 = math.exp %14 : vector<1x128xf32>
    %cst_12 = arith.constant 1.000000e+00 : f32
    %16 = vector.broadcast %cst_12 : f32 to vector<1x128xf32>
    %17 = arith.addf %16, %15 : vector<1x128xf32>
    %18 = arith.divf %16, %17 : vector<1x128xf32>
    %19 = vector.extract_strided_slice %9 {offsets = [0, 128], sizes = [1, 128], strides = [1, 1]} : vector<1x384xf32> to vector<1x128xf32>
    %20 = vector.extract_strided_slice %10 {offsets = [0, 128], sizes = [1, 128], strides = [1, 1]} : vector<1x384xf32> to vector<1x128xf32>
    %21 = arith.addf %19, %20 : vector<1x128xf32>
    %22 = arith.negf %21 : vector<1x128xf32>
    %23 = math.exp %22 : vector<1x128xf32>
    %cst_13 = arith.constant 1.000000e+00 : f32
    %24 = vector.broadcast %cst_13 : f32 to vector<1x128xf32>
    %25 = arith.addf %24, %23 : vector<1x128xf32>
    %26 = arith.divf %24, %25 : vector<1x128xf32>
    %27 = vector.extract_strided_slice %9 {offsets = [0, 256], sizes = [1, 128], strides = [1, 1]} : vector<1x384xf32> to vector<1x128xf32>
    %28 = vector.extract_strided_slice %10 {offsets = [0, 256], sizes = [1, 128], strides = [1, 1]} : vector<1x384xf32> to vector<1x128xf32>
    %29 = arith.addf %28, %7 : vector<1x128xf32>
    %30 = arith.mulf %18, %29 : vector<1x128xf32>
    %31 = arith.addf %27, %30 : vector<1x128xf32>
    %32 = math.tanh %31 : vector<1x128xf32>
    %cst_14 = arith.constant 1.000000e+00 : f32
    %33 = vector.broadcast %cst_14 : f32 to vector<1x128xf32>
    %34 = arith.subf %33, %26 : vector<1x128xf32>
    %35 = arith.mulf %34, %32 : vector<1x128xf32>
    %36 = arith.mulf %26, %8 : vector<1x128xf32>
    %37 = arith.addf %35, %36 : vector<1x128xf32>
    %c0_15 = arith.constant 0 : index
    %c0_16 = arith.constant 0 : index
    %38 = vector.load %arg10[%c0_15, %c0_16] : memref<8x128xf32, #tpu.memory_space<vmem>>, vector<1x128xf32>
    tpu.vector_store %arg10[%c0_15, %c0_16], %37 {strides = array<i32>} : memref<8x128xf32, #tpu.memory_space<vmem>>, vector<1x128xf32>,
    %39 = vector.extract_strided_slice %5 {offsets = [1, 0], sizes = [1, 384], strides = [1, 1]} : vector<8x384xf32> to vector<1x384xf32>
    %cst_17 = arith.constant dense<0.000000e+00> : vector<1x384xf32>
    %40 = tpu.matmul %37, %6, %cst_17 {dimension_numbers = #tpu.dot_dimension_numbers<[1], [0], [0], [1], [0, 0, 1, 1], [], []>} : vector<1x128xf32>, vector<128x384xf32>, vector<1x384xf32> -> vector<1x384xf32>
    %41 = vector.extract_strided_slice %39 {offsets = [0, 0], sizes = [1, 128], strides = [1, 1]} : vector<1x384xf32> to vector<1x128xf32>
    %42 = vector.extract_strided_slice %40 {offsets = [0, 0], sizes = [1, 128], strides = [1, 1]} : vector<1x384xf32> to vector<1x128xf32>
    %43 = arith.addf %41, %42 : vector<1x128xf32>
    %44 = arith.negf %43 : vector<1x128xf32>
    %45 = math.exp %44 : vector<1x128xf32>
    %cst_18 = arith.constant 1.000000e+00 : f32
    %46 = vector.broadcast %cst_18 : f32 to vector<1x128xf32>
    %47 = arith.addf %46, %45 : vector<1x128xf32>
    %48 = arith.divf %46, %47 : vector<1x128xf32>
    %49 = vector.extract_strided_slice %39 {offsets = [0, 128], sizes = [1, 128], strides = [1, 1]} : vector<1x384xf32> to vector<1x128xf32>
    %50 = vector.extract_strided_slice %40 {offsets = [0, 128], sizes = [1, 128], strides = [1, 1]} : vector<1x384xf32> to vector<1x128xf32>
    %51 = arith.addf %49, %50 : vector<1x128xf32>
    %52 = arith.negf %51 : vector<1x128xf32>
    %53 = math.exp %52 : vector<1x128xf32>
    %cst_19 = arith.constant 1.000000e+00 : f32
    %54 = vector.broadcast %cst_19 : f32 to vector<1x128xf32>
    %55 = arith.addf %54, %53 : vector<1x128xf32>
    %56 = arith.divf %54, %55 : vector<1x128xf32>
    %57 = vector.extract_strided_slice %39 {offsets = [0, 256], sizes = [1, 128], strides = [1, 1]} : vector<1x384xf32> to vector<1x128xf32>
    %58 = vector.extract_strided_slice %40 {offsets = [0, 256], sizes = [1, 128], strides = [1, 1]} : vector<1x384xf32> to vector<1x128xf32>
    %59 = arith.addf %58, %7 : vector<1x128xf32>
    %60 = arith.mulf %48, %59 : vector<1x128xf32>
    %61 = arith.addf %57, %60 : vector<1x128xf32>
    %62 = math.tanh %61 : vector<1x128xf32>
    %cst_20 = arith.constant 1.000000e+00 : f32
    %63 = vector.broadcast %cst_20 : f32 to vector<1x128xf32>
    %64 = arith.subf %63, %56 : vector<1x128xf32>
    %65 = arith.mulf %64, %62 : vector<1x128xf32>
    %66 = arith.mulf %56, %37 : vector<1x128xf32>
    %67 = arith.addf %65, %66 : vector<1x128xf32>
    %c1 = arith.constant 1 : index
    %c0_21 = arith.constant 0 : index
    %68 = vector.load %arg10[%c1, %c0_21] : memref<8x128xf32, #tpu.memory_space<vmem>>, vector<1x128xf32>
    tpu.vector_store %arg10[%c1, %c0_21], %67 {strides = array<i32>} : memref<8x128xf32, #tpu.memory_space<vmem>>, vector<1x128xf32>,
    %69 = vector.extract_strided_slice %5 {offsets = [2, 0], sizes = [1, 384], strides = [1, 1]} : vector<8x384xf32> to vector<1x384xf32>
    %cst_22 = arith.constant dense<0.000000e+00> : vector<1x384xf32>
    %70 = tpu.matmul %67, %6, %cst_22 {dimension_numbers = #tpu.dot_dimension_numbers<[1], [0], [0], [1], [0, 0, 1, 1], [], []>} : vector<1x128xf32>, vector<128x384xf32>, vector<1x384xf32> -> vector<1x384xf32>
    %71 = vector.extract_strided_slice %69 {offsets = [0, 0], sizes = [1, 128], strides = [1, 1]} : vector<1x384xf32> to vector<1x128xf32>
    %72 = vector.extract_strided_slice %70 {offsets = [0, 0], sizes = [1, 128], strides = [1, 1]} : vector<1x384xf32> to vector<1x128xf32>
    %73 = arith.addf %71, %72 : vector<1x128xf32>
    %74 = arith.negf %73 : vector<1x128xf32>
    %75 = math.exp %74 : vector<1x128xf32>
    %cst_23 = arith.constant 1.000000e+00 : f32
    %76 = vector.broadcast %cst_23 : f32 to vector<1x128xf32>
    %77 = arith.addf %76, %75 : vector<1x128xf32>
    %78 = arith.divf %76, %77 : vector<1x128xf32>
    %79 = vector.extract_strided_slice %69 {offsets = [0, 128], sizes = [1, 128], strides = [1, 1]} : vector<1x384xf32> to vector<1x128xf32>
    %80 = vector.extract_strided_slice %70 {offsets = [0, 128], sizes = [1, 128], strides = [1, 1]} : vector<1x384xf32> to vector<1x128xf32>
    %81 = arith.addf %79, %80 : vector<1x128xf32>
    %82 = arith.negf %81 : vector<1x128xf32>
    %83 = math.exp %82 : vector<1x128xf32>
    %cst_24 = arith.constant 1.000000e+00 : f32
    %84 = vector.broadcast %cst_24 : f32 to vector<1x128xf32>
    %85 = arith.addf %84, %83 : vector<1x128xf32>
    %86 = arith.divf %84, %85 : vector<1x128xf32>
    %87 = vector.extract_strided_slice %69 {offsets = [0, 256], sizes = [1, 128], strides = [1, 1]} : vector<1x384xf32> to vector<1x128xf32>
    %88 = vector.extract_strided_slice %70 {offsets = [0, 256], sizes = [1, 128], strides = [1, 1]} : vector<1x384xf32> to vector<1x128xf32>
    %89 = arith.addf %88, %7 : vector<1x128xf32>
    %90 = arith.mulf %78, %89 : vector<1x128xf32>
    %91 = arith.addf %87, %90 : vector<1x128xf32>
    %92 = math.tanh %91 : vector<1x128xf32>
    %cst_25 = arith.constant 1.000000e+00 : f32
    %93 = vector.broadcast %cst_25 : f32 to vector<1x128xf32>
    %94 = arith.subf %93, %86 : vector<1x128xf32>
    %95 = arith.mulf %94, %92 : vector<1x128xf32>
    %96 = arith.mulf %86, %67 : vector<1x128xf32>
    %97 = arith.addf %95, %96 : vector<1x128xf32>
    %c2 = arith.constant 2 : index
    %c0_26 = arith.constant 0 : index
    %98 = vector.load %arg10[%c2, %c0_26] : memref<8x128xf32, #tpu.memory_space<vmem>>, vector<1x128xf32>
    tpu.vector_store %arg10[%c2, %c0_26], %97 {strides = array<i32>} : memref<8x128xf32, #tpu.memory_space<vmem>>, vector<1x128xf32>,
    %99 = vector.extract_strided_slice %5 {offsets = [3, 0], sizes = [1, 384], strides = [1, 1]} : vector<8x384xf32> to vector<1x384xf32>
    %cst_27 = arith.constant dense<0.000000e+00> : vector<1x384xf32>
    %100 = tpu.matmul %97, %6, %cst_27 {dimension_numbers = #tpu.dot_dimension_numbers<[1], [0], [0], [1], [0, 0, 1, 1], [], []>} : vector<1x128xf32>, vector<128x384xf32>, vector<1x384xf32> -> vector<1x384xf32>
    %101 = vector.extract_strided_slice %99 {offsets = [0, 0], sizes = [1, 128], strides = [1, 1]} : vector<1x384xf32> to vector<1x128xf32>
    %102 = vector.extract_strided_slice %100 {offsets = [0, 0], sizes = [1, 128], strides = [1, 1]} : vector<1x384xf32> to vector<1x128xf32>
    %103 = arith.addf %101, %102 : vector<1x128xf32>
    %104 = arith.negf %103 : vector<1x128xf32>
    %105 = math.exp %104 : vector<1x128xf32>
    %cst_28 = arith.constant 1.000000e+00 : f32
    %106 = vector.broadcast %cst_28 : f32 to vector<1x128xf32>
    %107 = arith.addf %106, %105 : vector<1x128xf32>
    %108 = arith.divf %106, %107 : vector<1x128xf32>
    %109 = vector.extract_strided_slice %99 {offsets = [0, 128], sizes = [1, 128], strides = [1, 1]} : vector<1x384xf32> to vector<1x128xf32>
    %110 = vector.extract_strided_slice %100 {offsets = [0, 128], sizes = [1, 128], strides = [1, 1]} : vector<1x384xf32> to vector<1x128xf32>
    %111 = arith.addf %109, %110 : vector<1x128xf32>
    %112 = arith.negf %111 : vector<1x128xf32>
    %113 = math.exp %112 : vector<1x128xf32>
    %cst_29 = arith.constant 1.000000e+00 : f32
    %114 = vector.broadcast %cst_29 : f32 to vector<1x128xf32>
    %115 = arith.addf %114, %113 : vector<1x128xf32>
    %116 = arith.divf %114, %115 : vector<1x128xf32>
    %117 = vector.extract_strided_slice %99 {offsets = [0, 256], sizes = [1, 128], strides = [1, 1]} : vector<1x384xf32> to vector<1x128xf32>
    %118 = vector.extract_strided_slice %100 {offsets = [0, 256], sizes = [1, 128], strides = [1, 1]} : vector<1x384xf32> to vector<1x128xf32>
    %119 = arith.addf %118, %7 : vector<1x128xf32>
    %120 = arith.mulf %108, %119 : vector<1x128xf32>
    %121 = arith.addf %117, %120 : vector<1x128xf32>
    %122 = math.tanh %121 : vector<1x128xf32>
    %cst_30 = arith.constant 1.000000e+00 : f32
    %123 = vector.broadcast %cst_30 : f32 to vector<1x128xf32>
    %124 = arith.subf %123, %116 : vector<1x128xf32>
    %125 = arith.mulf %124, %122 : vector<1x128xf32>
    %126 = arith.mulf %116, %97 : vector<1x128xf32>
    %127 = arith.addf %125, %126 : vector<1x128xf32>
    %c3 = arith.constant 3 : index
    %c0_31 = arith.constant 0 : index
    %128 = vector.load %arg10[%c3, %c0_31] : memref<8x128xf32, #tpu.memory_space<vmem>>, vector<1x128xf32>
    tpu.vector_store %arg10[%c3, %c0_31], %127 {strides = array<i32>} : memref<8x128xf32, #tpu.memory_space<vmem>>, vector<1x128xf32>,
    %129 = vector.extract_strided_slice %5 {offsets = [4, 0], sizes = [1, 384], strides = [1, 1]} : vector<8x384xf32> to vector<1x384xf32>
    %cst_32 = arith.constant dense<0.000000e+00> : vector<1x384xf32>
    %130 = tpu.matmul %127, %6, %cst_32 {dimension_numbers = #tpu.dot_dimension_numbers<[1], [0], [0], [1], [0, 0, 1, 1], [], []>} : vector<1x128xf32>, vector<128x384xf32>, vector<1x384xf32> -> vector<1x384xf32>
    %131 = vector.extract_strided_slice %129 {offsets = [0, 0], sizes = [1, 128], strides = [1, 1]} : vector<1x384xf32> to vector<1x128xf32>
    %132 = vector.extract_strided_slice %130 {offsets = [0, 0], sizes = [1, 128], strides = [1, 1]} : vector<1x384xf32> to vector<1x128xf32>
    %133 = arith.addf %131, %132 : vector<1x128xf32>
    %134 = arith.negf %133 : vector<1x128xf32>
    %135 = math.exp %134 : vector<1x128xf32>
    %cst_33 = arith.constant 1.000000e+00 : f32
    %136 = vector.broadcast %cst_33 : f32 to vector<1x128xf32>
    %137 = arith.addf %136, %135 : vector<1x128xf32>
    %138 = arith.divf %136, %137 : vector<1x128xf32>
    %139 = vector.extract_strided_slice %129 {offsets = [0, 128], sizes = [1, 128], strides = [1, 1]} : vector<1x384xf32> to vector<1x128xf32>
    %140 = vector.extract_strided_slice %130 {offsets = [0, 128], sizes = [1, 128], strides = [1, 1]} : vector<1x384xf32> to vector<1x128xf32>
    %141 = arith.addf %139, %140 : vector<1x128xf32>
    %142 = arith.negf %141 : vector<1x128xf32>
    %143 = math.exp %142 : vector<1x128xf32>
    %cst_34 = arith.constant 1.000000e+00 : f32
    %144 = vector.broadcast %cst_34 : f32 to vector<1x128xf32>
    %145 = arith.addf %144, %143 : vector<1x128xf32>
    %146 = arith.divf %144, %145 : vector<1x128xf32>
    %147 = vector.extract_strided_slice %129 {offsets = [0, 256], sizes = [1, 128], strides = [1, 1]} : vector<1x384xf32> to vector<1x128xf32>
    %148 = vector.extract_strided_slice %130 {offsets = [0, 256], sizes = [1, 128], strides = [1, 1]} : vector<1x384xf32> to vector<1x128xf32>
    %149 = arith.addf %148, %7 : vector<1x128xf32>
    %150 = arith.mulf %138, %149 : vector<1x128xf32>
    %151 = arith.addf %147, %150 : vector<1x128xf32>
    %152 = math.tanh %151 : vector<1x128xf32>
    %cst_35 = arith.constant 1.000000e+00 : f32
    %153 = vector.broadcast %cst_35 : f32 to vector<1x128xf32>
    %154 = arith.subf %153, %146 : vector<1x128xf32>
    %155 = arith.mulf %154, %152 : vector<1x128xf32>
    %156 = arith.mulf %146, %127 : vector<1x128xf32>
    %157 = arith.addf %155, %156 : vector<1x128xf32>
    %c4 = arith.constant 4 : index
    %c0_36 = arith.constant 0 : index
    %158 = vector.load %arg10[%c4, %c0_36] : memref<8x128xf32, #tpu.memory_space<vmem>>, vector<1x128xf32>
    tpu.vector_store %arg10[%c4, %c0_36], %157 {strides = array<i32>} : memref<8x128xf32, #tpu.memory_space<vmem>>, vector<1x128xf32>,
    %159 = vector.extract_strided_slice %5 {offsets = [5, 0], sizes = [1, 384], strides = [1, 1]} : vector<8x384xf32> to vector<1x384xf32>
    %cst_37 = arith.constant dense<0.000000e+00> : vector<1x384xf32>
    %160 = tpu.matmul %157, %6, %cst_37 {dimension_numbers = #tpu.dot_dimension_numbers<[1], [0], [0], [1], [0, 0, 1, 1], [], []>} : vector<1x128xf32>, vector<128x384xf32>, vector<1x384xf32> -> vector<1x384xf32>
    %161 = vector.extract_strided_slice %159 {offsets = [0, 0], sizes = [1, 128], strides = [1, 1]} : vector<1x384xf32> to vector<1x128xf32>
    %162 = vector.extract_strided_slice %160 {offsets = [0, 0], sizes = [1, 128], strides = [1, 1]} : vector<1x384xf32> to vector<1x128xf32>
    %163 = arith.addf %161, %162 : vector<1x128xf32>
    %164 = arith.negf %163 : vector<1x128xf32>
    %165 = math.exp %164 : vector<1x128xf32>
    %cst_38 = arith.constant 1.000000e+00 : f32
    %166 = vector.broadcast %cst_38 : f32 to vector<1x128xf32>
    %167 = arith.addf %166, %165 : vector<1x128xf32>
    %168 = arith.divf %166, %167 : vector<1x128xf32>
    %169 = vector.extract_strided_slice %159 {offsets = [0, 128], sizes = [1, 128], strides = [1, 1]} : vector<1x384xf32> to vector<1x128xf32>
    %170 = vector.extract_strided_slice %160 {offsets = [0, 128], sizes = [1, 128], strides = [1, 1]} : vector<1x384xf32> to vector<1x128xf32>
    %171 = arith.addf %169, %170 : vector<1x128xf32>
    %172 = arith.negf %171 : vector<1x128xf32>
    %173 = math.exp %172 : vector<1x128xf32>
    %cst_39 = arith.constant 1.000000e+00 : f32
    %174 = vector.broadcast %cst_39 : f32 to vector<1x128xf32>
    %175 = arith.addf %174, %173 : vector<1x128xf32>
    %176 = arith.divf %174, %175 : vector<1x128xf32>
    %177 = vector.extract_strided_slice %159 {offsets = [0, 256], sizes = [1, 128], strides = [1, 1]} : vector<1x384xf32> to vector<1x128xf32>
    %178 = vector.extract_strided_slice %160 {offsets = [0, 256], sizes = [1, 128], strides = [1, 1]} : vector<1x384xf32> to vector<1x128xf32>
    %179 = arith.addf %178, %7 : vector<1x128xf32>
    %180 = arith.mulf %168, %179 : vector<1x128xf32>
    %181 = arith.addf %177, %180 : vector<1x128xf32>
    %182 = math.tanh %181 : vector<1x128xf32>
    %cst_40 = arith.constant 1.000000e+00 : f32
    %183 = vector.broadcast %cst_40 : f32 to vector<1x128xf32>
    %184 = arith.subf %183, %176 : vector<1x128xf32>
    %185 = arith.mulf %184, %182 : vector<1x128xf32>
    %186 = arith.mulf %176, %157 : vector<1x128xf32>
    %187 = arith.addf %185, %186 : vector<1x128xf32>
    %c5 = arith.constant 5 : index
    %c0_41 = arith.constant 0 : index
    %188 = vector.load %arg10[%c5, %c0_41] : memref<8x128xf32, #tpu.memory_space<vmem>>, vector<1x128xf32>
    tpu.vector_store %arg10[%c5, %c0_41], %187 {strides = array<i32>} : memref<8x128xf32, #tpu.memory_space<vmem>>, vector<1x128xf32>,
    %189 = vector.extract_strided_slice %5 {offsets = [6, 0], sizes = [1, 384], strides = [1, 1]} : vector<8x384xf32> to vector<1x384xf32>
    %cst_42 = arith.constant dense<0.000000e+00> : vector<1x384xf32>
    %190 = tpu.matmul %187, %6, %cst_42 {dimension_numbers = #tpu.dot_dimension_numbers<[1], [0], [0], [1], [0, 0, 1, 1], [], []>} : vector<1x128xf32>, vector<128x384xf32>, vector<1x384xf32> -> vector<1x384xf32>
    %191 = vector.extract_strided_slice %189 {offsets = [0, 0], sizes = [1, 128], strides = [1, 1]} : vector<1x384xf32> to vector<1x128xf32>
    %192 = vector.extract_strided_slice %190 {offsets = [0, 0], sizes = [1, 128], strides = [1, 1]} : vector<1x384xf32> to vector<1x128xf32>
    %193 = arith.addf %191, %192 : vector<1x128xf32>
    %194 = arith.negf %193 : vector<1x128xf32>
    %195 = math.exp %194 : vector<1x128xf32>
    %cst_43 = arith.constant 1.000000e+00 : f32
    %196 = vector.broadcast %cst_43 : f32 to vector<1x128xf32>
    %197 = arith.addf %196, %195 : vector<1x128xf32>
    %198 = arith.divf %196, %197 : vector<1x128xf32>
    %199 = vector.extract_strided_slice %189 {offsets = [0, 128], sizes = [1, 128], strides = [1, 1]} : vector<1x384xf32> to vector<1x128xf32>
    %200 = vector.extract_strided_slice %190 {offsets = [0, 128], sizes = [1, 128], strides = [1, 1]} : vector<1x384xf32> to vector<1x128xf32>
    %201 = arith.addf %199, %200 : vector<1x128xf32>
    %202 = arith.negf %201 : vector<1x128xf32>
    %203 = math.exp %202 : vector<1x128xf32>
    %cst_44 = arith.constant 1.000000e+00 : f32
    %204 = vector.broadcast %cst_44 : f32 to vector<1x128xf32>
    %205 = arith.addf %204, %203 : vector<1x128xf32>
    %206 = arith.divf %204, %205 : vector<1x128xf32>
    %207 = vector.extract_strided_slice %189 {offsets = [0, 256], sizes = [1, 128], strides = [1, 1]} : vector<1x384xf32> to vector<1x128xf32>
    %208 = vector.extract_strided_slice %190 {offsets = [0, 256], sizes = [1, 128], strides = [1, 1]} : vector<1x384xf32> to vector<1x128xf32>
    %209 = arith.addf %208, %7 : vector<1x128xf32>
    %210 = arith.mulf %198, %209 : vector<1x128xf32>
    %211 = arith.addf %207, %210 : vector<1x128xf32>
    %212 = math.tanh %211 : vector<1x128xf32>
    %cst_45 = arith.constant 1.000000e+00 : f32
    %213 = vector.broadcast %cst_45 : f32 to vector<1x128xf32>
    %214 = arith.subf %213, %206 : vector<1x128xf32>
    %215 = arith.mulf %214, %212 : vector<1x128xf32>
    %216 = arith.mulf %206, %187 : vector<1x128xf32>
    %217 = arith.addf %215, %216 : vector<1x128xf32>
    %c6 = arith.constant 6 : index
    %c0_46 = arith.constant 0 : index
    %218 = vector.load %arg10[%c6, %c0_46] : memref<8x128xf32, #tpu.memory_space<vmem>>, vector<1x128xf32>
    tpu.vector_store %arg10[%c6, %c0_46], %217 {strides = array<i32>} : memref<8x128xf32, #tpu.memory_space<vmem>>, vector<1x128xf32>,
    %219 = vector.extract_strided_slice %5 {offsets = [7, 0], sizes = [1, 384], strides = [1, 1]} : vector<8x384xf32> to vector<1x384xf32>
    %cst_47 = arith.constant dense<0.000000e+00> : vector<1x384xf32>
    %220 = tpu.matmul %217, %6, %cst_47 {dimension_numbers = #tpu.dot_dimension_numbers<[1], [0], [0], [1], [0, 0, 1, 1], [], []>} : vector<1x128xf32>, vector<128x384xf32>, vector<1x384xf32> -> vector<1x384xf32>
    %221 = vector.extract_strided_slice %219 {offsets = [0, 0], sizes = [1, 128], strides = [1, 1]} : vector<1x384xf32> to vector<1x128xf32>
    %222 = vector.extract_strided_slice %220 {offsets = [0, 0], sizes = [1, 128], strides = [1, 1]} : vector<1x384xf32> to vector<1x128xf32>
    %223 = arith.addf %221, %222 : vector<1x128xf32>
    %224 = arith.negf %223 : vector<1x128xf32>
    %225 = math.exp %224 : vector<1x128xf32>
    %cst_48 = arith.constant 1.000000e+00 : f32
    %226 = vector.broadcast %cst_48 : f32 to vector<1x128xf32>
    %227 = arith.addf %226, %225 : vector<1x128xf32>
    %228 = arith.divf %226, %227 : vector<1x128xf32>
    %229 = vector.extract_strided_slice %219 {offsets = [0, 128], sizes = [1, 128], strides = [1, 1]} : vector<1x384xf32> to vector<1x128xf32>
    %230 = vector.extract_strided_slice %220 {offsets = [0, 128], sizes = [1, 128], strides = [1, 1]} : vector<1x384xf32> to vector<1x128xf32>
    %231 = arith.addf %229, %230 : vector<1x128xf32>
    %232 = arith.negf %231 : vector<1x128xf32>
    %233 = math.exp %232 : vector<1x128xf32>
    %cst_49 = arith.constant 1.000000e+00 : f32
    %234 = vector.broadcast %cst_49 : f32 to vector<1x128xf32>
    %235 = arith.addf %234, %233 : vector<1x128xf32>
    %236 = arith.divf %234, %235 : vector<1x128xf32>
    %237 = vector.extract_strided_slice %219 {offsets = [0, 256], sizes = [1, 128], strides = [1, 1]} : vector<1x384xf32> to vector<1x128xf32>
    %238 = vector.extract_strided_slice %220 {offsets = [0, 256], sizes = [1, 128], strides = [1, 1]} : vector<1x384xf32> to vector<1x128xf32>
    %239 = arith.addf %238, %7 : vector<1x128xf32>
    %240 = arith.mulf %228, %239 : vector<1x128xf32>
    %241 = arith.addf %237, %240 : vector<1x128xf32>
    %242 = math.tanh %241 : vector<1x128xf32>
    %cst_50 = arith.constant 1.000000e+00 : f32
    %243 = vector.broadcast %cst_50 : f32 to vector<1x128xf32>
    %244 = arith.subf %243, %236 : vector<1x128xf32>
    %245 = arith.mulf %244, %242 : vector<1x128xf32>
    %246 = arith.mulf %236, %217 : vector<1x128xf32>
    %247 = arith.addf %245, %246 : vector<1x128xf32>
    %c7 = arith.constant 7 : index
    %c0_51 = arith.constant 0 : index
    %248 = vector.load %arg10[%c7, %c0_51] : memref<8x128xf32, #tpu.memory_space<vmem>>, vector<1x128xf32>
    tpu.vector_store %arg10[%c7, %c0_51], %247 {strides = array<i32>} : memref<8x128xf32, #tpu.memory_space<vmem>>, vector<1x128xf32>,
    %c0_52 = arith.constant 0 : index
    %c0_53 = arith.constant 0 : index
    %249 = vector.load %arg9[%c0_52, %c0_53] : memref<1x128xf32, #tpu.memory_space<vmem>>, vector<1x128xf32>
    tpu.vector_store %arg9[%c0_52, %c0_53], %247 {strides = array<i32>} : memref<1x128xf32, #tpu.memory_space<vmem>>, vector<1x128xf32>,
    %c0_54 = arith.constant 0 : index
    %c0_55 = arith.constant 0 : index
    %250 = vector.load %arg10[%c0_54, %c0_55] : memref<8x128xf32, #tpu.memory_space<vmem>>, vector<8x128xf32>
    %c0_56 = arith.constant 0 : index
    %c0_57 = arith.constant 0 : index
    %251 = vector.load %arg6[%c0_56, %c0_57] : memref<128x128xf32, #tpu.memory_space<vmem>>, vector<128x128xf32>
    %cst_58 = arith.constant dense<0.000000e+00> : vector<8x128xf32>
    %252 = tpu.matmul %250, %251, %cst_58 {dimension_numbers = #tpu.dot_dimension_numbers<[1], [0], [0], [1], [0, 0, 1, 1], [], []>} : vector<8x128xf32>, vector<128x128xf32>, vector<8x128xf32> -> vector<8x128xf32>
    %c0_59 = arith.constant 0 : index
    %c0_60 = arith.constant 0 : index
    %253 = vector.load %arg7[%c0_59, %c0_60] : memref<1x128xf32, #tpu.memory_space<vmem>>, vector<1x128xf32>
    %254 = vector.broadcast %253 : vector<1x128xf32> to vector<8x128xf32>
    %255 = arith.addf %252, %254 : vector<8x128xf32>
    %c0_61 = arith.constant 0 : index
    %c0_62 = arith.constant 0 : index
    %256 = vector.load %arg8[%c0_61, %c0_62] : memref<8x128xf32, #tpu.memory_space<vmem>>, vector<8x128xf32>
    tpu.vector_store %arg8[%c0_61, %c0_62], %255 {strides = array<i32>} : memref<8x128xf32, #tpu.memory_space<vmem>>, vector<8x128xf32>,
    return
  }
}

</mosaic_0001>

<llo_original>
// kernel: gru_rnn_forward.1
$region0: #{gru_rnn_forward.1}
  #allocation0 [shape = 'u32[]', space=smem, size = 0x4, offset = 0x4, fixed_abs, tag = 'smem constant byte address 0x4 - core index']
  #allocation1 [shape = 'u32[144,128]{1,0:T(1,128)}', space=vmem, size = 0x12000, scoped, tag = 'internal scratch']
  #allocation2 [shape = 'f32[8,128]{1,0:T(8,128)}', space=vmem, size = 0x1000, scoped, tag = 'scratch operand']
  %s0 = inlined_call_operand.vmem [shape: f32[8,32], index: 0, kind: input, shape index: {}]
  %s1 = inlined_call_operand.vmem [shape: f32[1,128], index: 1, kind: input, shape index: {}]
  %s2 = inlined_call_operand.vmem [shape: f32[32,384], index: 2, kind: input, shape index: {}]
  %s3 = inlined_call_operand.vmem [shape: f32[128,384], index: 3, kind: input, shape index: {}]
  %s4 = inlined_call_operand.vmem [shape: f32[1,384], index: 4, kind: input, shape index: {}]
  %s5 = inlined_call_operand.vmem [shape: f32[1,128], index: 5, kind: input, shape index: {}]
  %s6 = inlined_call_operand.vmem [shape: f32[128,128], index: 6, kind: input, shape index: {}]
  %s7 = inlined_call_operand.vmem [shape: f32[1,128], index: 7, kind: input, shape index: {}]
  %s8 = inlined_call_operand.hbm [shape: f32[8,128], index: 8, kind: output, shape index: {0}]
  %s9 = inlined_call_operand.hbm [shape: f32[1,128], index: 9, kind: output, shape index: {1}]
  %10 = xla_tuple %s8, %s9
  %s11 = sld [smem:[#allocation0]]
  $region50: #{gru_rnn_forward.1} parent=0
    _
  %s13 = ssub.s32 1, %s11
  %s14 = scalar_select 0, %s13, %s11
  $region1: #{gru_rnn_forward.1} parent=0
    #allocation3 [shape = 'u8[4096]{0}', space=vmem, size = 0x1000, scoped, tag = 'output window, operand 0, single buffered']
    #allocation4 [shape = 's32[1]{0}', space=sflag, size = 0x4, scoped, tag = 'scoped memory for gru_rnn_forward.1']
    #allocation5 [shape = 'u8[512]{0}', space=vmem, size = 0x400, scoped, tag = 'output window, operand 1, single buffered']
    #allocation6 [shape = 's32[1]{0}', space=sflag, size = 0x4, scoped, tag = 'scoped memory for gru_rnn_forward.1']
    %15 = vsyncpa [#allocation4], 0
    %16 = vsyncpa [#allocation6], 0
    // Predicated region
    $region2: #{gru_rnn_forward.1} parent=1 // pred_check
      _
    $region3: #{gru_rnn_forward.1} parent=1 // pred_check_branch
      %18 = sbr.rel (0) target = $region5
    $region4: #{gru_rnn_forward.1} parent=1 // pred_region
      _
    $region5: #{gru_rnn_forward.1} parent=1 // pred_fallthru
      _
    // Predicated region
    $region6: #{gru_rnn_forward.1} parent=1 // pred_check
      _
    $region7: #{gru_rnn_forward.1} parent=1 // pred_check_branch
      %20 = sbr.rel (0) target = $region9
    $region8: #{gru_rnn_forward.1} parent=1 // pred_region
      _
    $region9: #{gru_rnn_forward.1} parent=1 // pred_fallthru
      _
    // Predicated region
    $region10: #{gru_rnn_forward.1} parent=1 // pred_check
      _
    $region11: #{gru_rnn_forward.1} parent=1 // pred_check_branch
      %22 = sbr.rel (0) target = $region13
    $region12: #{gru_rnn_forward.1} parent=1 // pred_region
      _
    $region13: #{gru_rnn_forward.1} parent=1 // pred_fallthru
      _
    // Predicated region
    $region14: #{gru_rnn_forward.1} parent=1 // pred_check
      _
    $region15: #{gru_rnn_forward.1} parent=1 // pred_check_branch
      %24 = sbr.rel (0) target = $region17
    $region16: #{gru_rnn_forward.1} parent=1 // pred_region
      _
    $region17: #{gru_rnn_forward.1} parent=1 // pred_fallthru
      _
    // Predicated region
    $region18: #{gru_rnn_forward.1} parent=1 // pred_check
      _
    $region19: #{gru_rnn_forward.1} parent=1 // pred_check_branch
      %26 = sbr.rel (0) target = $region21
    $region20: #{gru_rnn_forward.1} parent=1 // pred_region
      _
    $region21: #{gru_rnn_forward.1} parent=1 // pred_fallthru
      _
    // Predicated region
    $region22: #{gru_rnn_forward.1} parent=1 // pred_check
      _
    $region23: #{gru_rnn_forward.1} parent=1 // pred_check_branch
      %28 = sbr.rel (0) target = $region25
    $region24: #{gru_rnn_forward.1} parent=1 // pred_region
      _
    $region25: #{gru_rnn_forward.1} parent=1 // pred_fallthru
      _
    // Predicated region
    $region26: #{gru_rnn_forward.1} parent=1 // pred_check
      _
    $region27: #{gru_rnn_forward.1} parent=1 // pred_check_branch
      %30 = sbr.rel (0) target = $region29
    $region28: #{gru_rnn_forward.1} parent=1 // pred_region
      _
    $region29: #{gru_rnn_forward.1} parent=1 // pred_fallthru
      _
    // Predicated region
    $region30: #{gru_rnn_forward.1} parent=1 // pred_check
      _
    $region31: #{gru_rnn_forward.1} parent=1 // pred_check_branch
      %32 = sbr.rel (0) target = $region33
    $region32: #{gru_rnn_forward.1} parent=1 // pred_region
      _
    $region33: #{gru_rnn_forward.1} parent=1 // pred_fallthru
      _
    %v33 = vld [vmem:[%s0] sm:$0xff]
    %v34 = vld [vmem:[%s2] sm:$0xff]
    %v35 = vld [vmem:[%s2 + $0x8] sm:$0xff]
    %v36 = vld [vmem:[%s2 + $0x10] sm:$0xff]
    %v37 = vld [vmem:[%s2 + $0x18] sm:$0xff]
    %v38 = vld [vmem:[%s2 + $0x20] sm:$0xff]
    %v39 = vld [vmem:[%s2 + $0x28] sm:$0xff]
    %v40 = vld [vmem:[%s2 + $0x30] sm:$0xff]
    %v41 = vld [vmem:[%s2 + $0x38] sm:$0xff]
    %v42 = vld [vmem:[%s2 + $0x40] sm:$0xff]
    %v43 = vld [vmem:[%s2 + $0x48] sm:$0xff]
    %v44 = vld [vmem:[%s2 + $0x50] sm:$0xff]
    %v45 = vld [vmem:[%s2 + $0x58] sm:$0xff]
    %v46 = vld [vmem:[%s4] sm:$0x7]
    %v48 = vlaneseq
    %v49 = vshrl.u32 %v48, 7
    %v50 = vsub.s32 0, %v49
    %v51 = vrot.slane %v46, %v50
    %v52 = vlaneseq
    %v53 = vshrl.u32 %v52, 7
    %v54 = vsub.s32 1, %v53
    %v55 = vrot.slane %v46, %v54
    %v56 = vlaneseq
    %v57 = vshrl.u32 %v56, 7
    %v58 = vsub.s32 2, %v57
    %v59 = vrot.slane %v46, %v58
    %vm63 = vcmask 261120
    %v65 = vsel %vm63, %v33, 0
    %67 = vmatprep.subr.mxu0 %v35
    %68 = vmatpush1.msra.mxu0 %v34
    %69 = vmatprep.subr.mxu0 %v38
    %70 = vmatpush1.msra.mxu0 %v37
    %71 = vmatprep.subr.mxu0 %v41
    %72 = vmatpush1.msra.mxu0 %v40
    %73 = vmatprep.subr.mxu0 %v44
    %74 = vmatpush1.msra.mxu0 %v43
    %75 = vmatprep.subr.mxu0 0.0
    %76 = vmatpush1.msra.mxu0 0.0
    %77 = vmatprep.subr.mxu0 0.0
    %78 = vmatpush1.msra.mxu0 0.0
    %79 = vmatprep.subr.mxu0 0.0
    %80 = vmatpush1.msra.mxu0 0.0
    %81 = vmatprep.subr.mxu0 0.0
    %82 = vmatpush1.msra.mxu0 0.0
    %83 = vmatprep.subr.mxu0 0.0
    %84 = vmatpush1.msra.mxu0 0.0
    %85 = vmatprep.subr.mxu0 0.0
    %86 = vmatpush1.msra.mxu0 0.0
    %87 = vmatprep.subr.mxu0 0.0
    %88 = vmatpush1.msra.mxu0 0.0
    %89 = vmatprep.subr.mxu0 0.0
    %90 = vmatpush1.msra.mxu0 0.0
    %91 = vmatprep.subr.mxu0 0.0
    %92 = vmatpush1.msra.mxu0 0.0
    %93 = vmatprep.subr.mxu0 0.0
    %94 = vmatpush1.msra.mxu0 0.0
    %95 = vmatprep.subr.mxu0 0.0
    %96 = vmatpush1.msra.mxu0 0.0
    %97 = vmatprep.subr.mxu0 0.0
    %98 = vmatpush1.msra.mxu0 0.0
    %99 = vmatprep.subr.mxu0 0.0
    %100 = vmatpush1.msra.mxu0 0.0
    %101 = vmatprep.subr.mxu0 0.0
    %102 = vmatpush1.msra.mxu0 0.0
    %103 = vmatprep.subr.mxu0 0.0
    %104 = vmatpush1.msra.mxu0 0.0
    %105 = vmatprep.subr.mxu0 0.0
    %106 = vmatpush1.msra.mxu0 0.0
    %107 = vmatprep.subr.mxu0 0.0
    %108 = vmatpush1.msra.mxu0 0.0
    %109 = vmatprep.subr.mxu0 0.0
    %110 = vmatpush1.msra.mxu0 0.0
    %111 = vmatprep.subr.mxu0 0.0
    %112 = vmatpush1.msra.mxu0 0.0
    %113 = vmatprep.subr.mxu0 0.0
    %114 = vmatpush1.msra.mxu0 0.0
    %115 = vmatprep.subr.mxu0 0.0
    %116 = vmatpush1.msra.mxu0 0.0
    %117 = vmatprep.subr.mxu0 0.0
    %118 = vmatpush1.msra.mxu0 0.0
    %119 = vmatprep.subr.mxu0 0.0
    %120 = vmatpush1.msra.mxu0 0.0
    %121 = vmatprep.subr.mxu0 0.0
    %122 = vmatpush1.msra.mxu0 0.0
    %123 = vmatprep.subr.mxu0 0.0
    %124 = vmatpush1.msra.mxu0 0.0
    %125 = vmatprep.subr.mxu0 0.0
    %126 = vmatpush1.msra.mxu0 0.0
    %127 = vmatprep.subr.mxu0 0.0
    %128 = vmatpush1.msra.mxu0 0.0
    %129 = vmatprep.subr.mxu0 0.0
    %130 = vmatpush1.msra.mxu0 0.0
    %131 = vmatprep.mubr.f32.mxu0 0.0
    %132 = vmatmul.mubr.f32.gmra.mrb[0].mxu0 %v65
    %v133 = vpop.f32.mrb[0].mxu0
    %v134 = vadd.f32 %v51, %v133
    %v135 = vpop.f32.mrb[0].mxu0
    %v136 = vadd.f32 %v55, %v135
    %137 = vdwg.mxu0
    %138 = vmatprep.subr.mxu0 0.0
    %139 = vmatpush1.msra.mxu0 %v36
    %140 = vmatprep.subr.mxu0 0.0
    %141 = vmatpush1.msra.mxu0 %v39
    %142 = vmatprep.subr.mxu0 0.0
    %143 = vmatpush1.msra.mxu0 %v42
    %144 = vmatprep.subr.mxu0 0.0
    %145 = vmatpush1.msra.mxu0 %v45
    %146 = vmatprep.subr.mxu0 0.0
    %147 = vmatpush1.msra.mxu0 0.0
    %148 = vmatprep.subr.mxu0 0.0
    %149 = vmatpush1.msra.mxu0 0.0
    %150 = vmatprep.subr.mxu0 0.0
    %151 = vmatpush1.msra.mxu0 0.0
    %152 = vmatprep.subr.mxu0 0.0
    %153 = vmatpush1.msra.mxu0 0.0
    %154 = vmatprep.subr.mxu0 0.0
    %155 = vmatpush1.msra.mxu0 0.0
    %156 = vmatprep.subr.mxu0 0.0
    %157 = vmatpush1.msra.mxu0 0.0
    %158 = vmatprep.subr.mxu0 0.0
    %159 = vmatpush1.msra.mxu0 0.0
    %160 = vmatprep.subr.mxu0 0.0
    %161 = vmatpush1.msra.mxu0 0.0
    %162 = vmatprep.subr.mxu0 0.0
    %163 = vmatpush1.msra.mxu0 0.0
    %164 = vmatprep.subr.mxu0 0.0
    %165 = vmatpush1.msra.mxu0 0.0
    %166 = vmatprep.subr.mxu0 0.0
    %167 = vmatpush1.msra.mxu0 0.0
    %168 = vmatprep.subr.mxu0 0.0
    %169 = vmatpush1.msra.mxu0 0.0
    %170 = vmatprep.subr.mxu0 0.0
    %171 = vmatpush1.msra.mxu0 0.0
    %172 = vmatprep.subr.mxu0 0.0
    %173 = vmatpush1.msra.mxu0 0.0
    %174 = vmatprep.subr.mxu0 0.0
    %175 = vmatpush1.msra.mxu0 0.0
    %176 = vmatprep.subr.mxu0 0.0
    %177 = vmatpush1.msra.mxu0 0.0
    %178 = vmatprep.subr.mxu0 0.0
    %179 = vmatpush1.msra.mxu0 0.0
    %180 = vmatprep.subr.mxu0 0.0
    %181 = vmatpush1.msra.mxu0 0.0
    %182 = vmatprep.subr.mxu0 0.0
    %183 = vmatpush1.msra.mxu0 0.0
    %184 = vmatprep.subr.mxu0 0.0
    %185 = vmatpush1.msra.mxu0 0.0
    %186 = vmatprep.subr.mxu0 0.0
    %187 = vmatpush1.msra.mxu0 0.0
    %188 = vmatprep.subr.mxu0 0.0
    %189 = vmatpush1.msra.mxu0 0.0
    %190 = vmatprep.subr.mxu0 0.0
    %191 = vmatpush1.msra.mxu0 0.0
    %192 = vmatprep.subr.mxu0 0.0
    %193 = vmatpush1.msra.mxu0 0.0
    %194 = vmatprep.subr.mxu0 0.0
    %195 = vmatpush1.msra.mxu0 0.0
    %196 = vmatprep.subr.mxu0 0.0
    %197 = vmatpush1.msra.mxu0 0.0
    %198 = vmatprep.subr.mxu0 0.0
    %199 = vmatpush1.msra.mxu0 0.0
    %200 = vmatprep.subr.mxu0 0.0
    %201 = vmatpush1.msra.mxu0 0.0
    %202 = vmatprep.mubr.f32.mxu0 0.0
    %203 = vmatmul.mubr.f32.gmra.mrb[0].mxu0 %v65
    %v204 = vpop.f32.mrb[0].mxu0
    %v205 = vadd.f32 %v59, %v204
    %v206 = vpop.f32.mrb[0].mxu0
    %207 = vdwg.mxu0
    %v208 = vld [vmem:[%s3] sm:$0xff]
    %v209 = vld [vmem:[%s3 + $0x8] sm:$0xff]
    %v210 = vld [vmem:[%s3 + $0x10] sm:$0xff]
    %v211 = vld [vmem:[%s3 + $0x18] sm:$0xff]
    %v212 = vld [vmem:[%s3 + $0x20] sm:$0xff]
    %v213 = vld [vmem:[%s3 + $0x28] sm:$0xff]
    %v214 = vld [vmem:[%s3 + $0x30] sm:$0xff]
    %v215 = vld [vmem:[%s3 + $0x38] sm:$0xff]
    %v216 = vld [vmem:[%s3 + $0x40] sm:$0xff]
    %v217 = vld [vmem:[%s3 + $0x48] sm:$0xff]
    %v218 = vld [vmem:[%s3 + $0x50] sm:$0xff]
    %v219 = vld [vmem:[%s3 + $0x58] sm:$0xff]
    %v220 = vld [vmem:[%s3 + $0x60] sm:$0xff]
    %v221 = vld [vmem:[%s3 + $0x68] sm:$0xff]
    %v222 = vld [vmem:[%s3 + $0x70] sm:$0xff]
    %v223 = vld [vmem:[%s3 + $0x78] sm:$0xff]
    %v224 = vld [vmem:[%s3 + $0x80] sm:$0xff]
    %v225 = vld [vmem:[%s3 + $0x88] sm:$0xff]
    %v226 = vld [vmem:[%s3 + $0x90] sm:$0xff]
    %v227 = vld [vmem:[%s3 + $0x98] sm:$0xff]
    %v228 = vld [vmem:[%s3 + $0xa0] sm:$0xff]
    %v229 = vld [vmem:[%s3 + $0xa8] sm:$0xff]
    %v230 = vld [vmem:[%s3 + $0xb0] sm:$0xff]
    %v231 = vld [vmem:[%s3 + $0xb8] sm:$0xff]
    %v232 = vld [vmem:[%s3 + $0xc0] sm:$0xff]
    %v233 = vld [vmem:[%s3 + $0xc8] sm:$0xff]
    %v234 = vld [vmem:[%s3 + $0xd0] sm:$0xff]
    %v235 = vld [vmem:[%s3 + $0xd8] sm:$0xff]
    %v236 = vld [vmem:[%s3 + $0xe0] sm:$0xff]
    %v237 = vld [vmem:[%s3 + $0xe8] sm:$0xff]
    %v238 = vld [vmem:[%s3 + $0xf0] sm:$0xff]
    %v239 = vld [vmem:[%s3 + $0xf8] sm:$0xff]
    %v240 = vld [vmem:[%s3 + $0x100] sm:$0xff]
    %v241 = vld [vmem:[%s3 + $0x108] sm:$0xff]
    %v242 = vld [vmem:[%s3 + $0x110] sm:$0xff]
    %v243 = vld [vmem:[%s3 + $0x118] sm:$0xff]
    %v244 = vld [vmem:[%s3 + $0x120] sm:$0xff]
    %v245 = vld [vmem:[%s3 + $0x128] sm:$0xff]
    %v246 = vld [vmem:[%s3 + $0x130] sm:$0xff]
    %v247 = vld [vmem:[%s3 + $0x138] sm:$0xff]
    %v248 = vld [vmem:[%s3 + $0x140] sm:$0xff]
    %v249 = vld [vmem:[%s3 + $0x148] sm:$0xff]
    %v250 = vld [vmem:[%s3 + $0x150] sm:$0xff]
    %v251 = vld [vmem:[%s3 + $0x158] sm:$0xff]
    %v252 = vld [vmem:[%s3 + $0x160] sm:$0xff]
    %v253 = vld [vmem:[%s3 + $0x168] sm:$0xff]
    %v254 = vld [vmem:[%s3 + $0x170] sm:$0xff]
    %v255 = vld [vmem:[%s3 + $0x178] sm:$0xff]
    %v256 = vld [vmem:[%s5] sm:$0x1]
    %v257 = vld [vmem:[%s1] sm:$0x1]
    %258 = vmatprep.subr.mxu0 %v209
    %259 = vmatpush1.msra.mxu0 %v208
    %260 = vmatprep.subr.mxu0 %v212
    %261 = vmatpush1.msra.mxu0 %v211
    %262 = vmatprep.subr.mxu0 %v215
    %263 = vmatpush1.msra.mxu0 %v214
    %264 = vmatprep.subr.mxu0 %v218
    %265 = vmatpush1.msra.mxu0 %v217
    %266 = vmatprep.subr.mxu0 %v221
    %267 = vmatpush1.msra.mxu0 %v220
    %268 = vmatprep.subr.mxu0 %v224
    %269 = vmatpush1.msra.mxu0 %v223
    %270 = vmatprep.subr.mxu0 %v227
    %271 = vmatpush1.msra.mxu0 %v226
    %272 = vmatprep.subr.mxu0 %v230
    %273 = vmatpush1.msra.mxu0 %v229
    %274 = vmatprep.subr.mxu0 %v233
    %275 = vmatpush1.msra.mxu0 %v232
    %276 = vmatprep.subr.mxu0 %v236
    %277 = vmatpush1.msra.mxu0 %v235
    %278 = vmatprep.subr.mxu0 %v239
    %279 = vmatpush1.msra.mxu0 %v238
    %280 = vmatprep.subr.mxu0 %v242
    %281 = vmatpush1.msra.mxu0 %v241
    %282 = vmatprep.subr.mxu0 %v245
    %283 = vmatpush1.msra.mxu0 %v244
    %284 = vmatprep.subr.mxu0 %v248
    %285 = vmatpush1.msra.mxu0 %v247
    %286 = vmatprep.subr.mxu0 %v251
    %287 = vmatpush1.msra.mxu0 %v250
    %288 = vmatprep.subr.mxu0 %v254
    %289 = vmatpush1.msra.mxu0 %v253
    %290 = vmatprep.subr.mxu0 0.0
    %291 = vmatpush1.msra.mxu0 0.0
    %292 = vmatprep.subr.mxu0 0.0
    %293 = vmatpush1.msra.mxu0 0.0
    %294 = vmatprep.subr.mxu0 0.0
    %295 = vmatpush1.msra.mxu0 0.0
    %296 = vmatprep.subr.mxu0 0.0
    %297 = vmatpush1.msra.mxu0 0.0
    %298 = vmatprep.subr.mxu0 0.0
    %299 = vmatpush1.msra.mxu0 0.0
    %300 = vmatprep.subr.mxu0 0.0
    %301 = vmatpush1.msra.mxu0 0.0
    %302 = vmatprep.subr.mxu0 0.0
    %303 = vmatpush1.msra.mxu0 0.0
    %304 = vmatprep.subr.mxu0 0.0
    %305 = vmatpush1.msra.mxu0 0.0
    %306 = vmatprep.subr.mxu0 0.0
    %307 = vmatpush1.msra.mxu0 0.0
    %308 = vmatprep.subr.mxu0 0.0
    %309 = vmatpush1.msra.mxu0 0.0
    %310 = vmatprep.subr.mxu0 0.0
    %311 = vmatpush1.msra.mxu0 0.0
    %312 = vmatprep.subr.mxu0 0.0
    %313 = vmatpush1.msra.mxu0 0.0
    %314 = vmatprep.subr.mxu0 0.0
    %315 = vmatpush1.msra.mxu0 0.0
    %316 = vmatprep.subr.mxu0 0.0
    %317 = vmatpush1.msra.mxu0 0.0
    %318 = vmatprep.subr.mxu0 0.0
    %319 = vmatpush1.msra.mxu0 0.0
    %320 = vmatprep.subr.mxu0 0.0
    %321 = vmatpush1.msra.mxu0 0.0
    %322 = vmatprep.mubr.f32.mxu0 0.0
    %323 = vmatmul.mubr.f32.gmra.mrb[0].mxu0 %v257
    %v324 = vpop.f32.mrb[0].mxu0
    %v325 = vadd.f32 0.0, %v324
    %v326 = vpop.f32.mrb[0].mxu0
    %v327 = vadd.f32 0.0, %v326
    %328 = vdwg.mxu0
    %329 = vmatprep.subr.mxu0 0.0
    %330 = vmatpush1.msra.mxu0 %v210
    %331 = vmatprep.subr.mxu0 0.0
    %332 = vmatpush1.msra.mxu0 %v213
    %333 = vmatprep.subr.mxu0 0.0
    %334 = vmatpush1.msra.mxu0 %v216
    %335 = vmatprep.subr.mxu0 0.0
    %336 = vmatpush1.msra.mxu0 %v219
    %337 = vmatprep.subr.mxu0 0.0
    %338 = vmatpush1.msra.mxu0 %v222
    %339 = vmatprep.subr.mxu0 0.0
    %340 = vmatpush1.msra.mxu0 %v225
    %341 = vmatprep.subr.mxu0 0.0
    %342 = vmatpush1.msra.mxu0 %v228
    %343 = vmatprep.subr.mxu0 0.0
    %344 = vmatpush1.msra.mxu0 %v231
    %345 = vmatprep.subr.mxu0 0.0
    %346 = vmatpush1.msra.mxu0 %v234
    %347 = vmatprep.subr.mxu0 0.0
    %348 = vmatpush1.msra.mxu0 %v237
    %349 = vmatprep.subr.mxu0 0.0
    %350 = vmatpush1.msra.mxu0 %v240
    %351 = vmatprep.subr.mxu0 0.0
    %352 = vmatpush1.msra.mxu0 %v243
    %353 = vmatprep.subr.mxu0 0.0
    %354 = vmatpush1.msra.mxu0 %v246
    %355 = vmatprep.subr.mxu0 0.0
    %356 = vmatpush1.msra.mxu0 %v249
    %357 = vmatprep.subr.mxu0 0.0
    %358 = vmatpush1.msra.mxu0 %v252
    %359 = vmatprep.subr.mxu0 0.0
    %360 = vmatpush1.msra.mxu0 %v255
    %361 = vmatprep.subr.mxu0 0.0
    %362 = vmatpush1.msra.mxu0 0.0
    %363 = vmatprep.subr.mxu0 0.0
    %364 = vmatpush1.msra.mxu0 0.0
    %365 = vmatprep.subr.mxu0 0.0
    %366 = vmatpush1.msra.mxu0 0.0
    %367 = vmatprep.subr.mxu0 0.0
    %368 = vmatpush1.msra.mxu0 0.0
    %369 = vmatprep.subr.mxu0 0.0
    %370 = vmatpush1.msra.mxu0 0.0
    %371 = vmatprep.subr.mxu0 0.0
    %372 = vmatpush1.msra.mxu0 0.0
    %373 = vmatprep.subr.mxu0 0.0
    %374 = vmatpush1.msra.mxu0 0.0
    %375 = vmatprep.subr.mxu0 0.0
    %376 = vmatpush1.msra.mxu0 0.0
    %377 = vmatprep.subr.mxu0 0.0
    %378 = vmatpush1.msra.mxu0 0.0
    %379 = vmatprep.subr.mxu0 0.0
    %380 = vmatpush1.msra.mxu0 0.0
    %381 = vmatprep.subr.mxu0 0.0
    %382 = vmatpush1.msra.mxu0 0.0
    %383 = vmatprep.subr.mxu0 0.0
    %384 = vmatpush1.msra.mxu0 0.0
    %385 = vmatprep.subr.mxu0 0.0
    %386 = vmatpush1.msra.mxu0 0.0
    %387 = vmatprep.subr.mxu0 0.0
    %388 = vmatpush1.msra.mxu0 0.0
    %389 = vmatprep.subr.mxu0 0.0
    %390 = vmatpush1.msra.mxu0 0.0
    %391 = vmatprep.subr.mxu0 0.0
    %392 = vmatpush1.msra.mxu0 0.0
    %393 = vmatprep.mubr.f32.mxu0 0.0
    %394 = vmatmul.mubr.f32.gmra.mrb[0].mxu0 %v257
    %v395 = vpop.f32.mrb[0].mxu0
    %v396 = vadd.f32 0.0, %v395
    %v397 = vpop.f32.mrb[0].mxu0
    %398 = vdwg.mxu0
    %v399 = vadd.f32 %v134, %v325
    %v400 = vxor.u32 %v399, 2147483648
    %v401 = vmul.f32 %v400, 1.442695
    %v402 = vpow.pop %v401
    %v403 = vadd.f32 %v402, 1.0
    %v404 = vrcp.pop %v403
    %v405 = vmul.f32 1.0, %v404
    %v406 = vadd.f32 %v136, %v327
    %v407 = vxor.u32 %v406, 2147483648
    %v408 = vmul.f32 %v407, 1.442695
    %v409 = vpow.pop %v408
    %v410 = vadd.f32 %v409, 1.0
    %v411 = vrcp.pop %v410
    %v412 = vmul.f32 1.0, %v411
    %v413 = vadd.f32 %v396, %v256
    %v414 = vmul.f32 %v405, %v413
    %v415 = vadd.f32 %v205, %v414
    %v416 = vtanh.pop %v415
    %v417 = vsub.f32 1.0, %v412
    %v418 = vmul.f32 %v417, %v416
    %v419 = vmul.f32 %v412, %v257
    %v420 = vadd.f32 %v418, %v419
    %421 = vst [vmem:[#allocation2] sm:$0x1] %v420
    %422 = vmatprep.subr.mxu0 %v209
    %423 = vmatpush1.msra.mxu0 %v208
    %424 = vmatprep.subr.mxu0 %v212
    %425 = vmatpush1.msra.mxu0 %v211
    %426 = vmatprep.subr.mxu0 %v215
    %427 = vmatpush1.msra.mxu0 %v214
    %428 = vmatprep.subr.mxu0 %v218
    %429 = vmatpush1.msra.mxu0 %v217
    %430 = vmatprep.subr.mxu0 %v221
    %431 = vmatpush1.msra.mxu0 %v220
    %432 = vmatprep.subr.mxu0 %v224
    %433 = vmatpush1.msra.mxu0 %v223
    %434 = vmatprep.subr.mxu0 %v227
    %435 = vmatpush1.msra.mxu0 %v226
    %436 = vmatprep.subr.mxu0 %v230
    %437 = vmatpush1.msra.mxu0 %v229
    %438 = vmatprep.subr.mxu0 %v233
    %439 = vmatpush1.msra.mxu0 %v232
    %440 = vmatprep.subr.mxu0 %v236
    %441 = vmatpush1.msra.mxu0 %v235
    %442 = vmatprep.subr.mxu0 %v239
    %443 = vmatpush1.msra.mxu0 %v238
    %444 = vmatprep.subr.mxu0 %v242
    %445 = vmatpush1.msra.mxu0 %v241
    %446 = vmatprep.subr.mxu0 %v245
    %447 = vmatpush1.msra.mxu0 %v244
    %448 = vmatprep.subr.mxu0 %v248
    %449 = vmatpush1.msra.mxu0 %v247
    %450 = vmatprep.subr.mxu0 %v251
    %451 = vmatpush1.msra.mxu0 %v250
    %452 = vmatprep.subr.mxu0 %v254
    %453 = vmatpush1.msra.mxu0 %v253
    %454 = vmatprep.subr.mxu0 0.0
    %455 = vmatpush1.msra.mxu0 0.0
    %456 = vmatprep.subr.mxu0 0.0
    %457 = vmatpush1.msra.mxu0 0.0
    %458 = vmatprep.subr.mxu0 0.0
    %459 = vmatpush1.msra.mxu0 0.0
    %460 = vmatprep.subr.mxu0 0.0
    %461 = vmatpush1.msra.mxu0 0.0
    %462 = vmatprep.subr.mxu0 0.0
    %463 = vmatpush1.msra.mxu0 0.0
    %464 = vmatprep.subr.mxu0 0.0
    %465 = vmatpush1.msra.mxu0 0.0
    %466 = vmatprep.subr.mxu0 0.0
    %467 = vmatpush1.msra.mxu0 0.0
    %468 = vmatprep.subr.mxu0 0.0
    %469 = vmatpush1.msra.mxu0 0.0
    %470 = vmatprep.subr.mxu0 0.0
    %471 = vmatpush1.msra.mxu0 0.0
    %472 = vmatprep.subr.mxu0 0.0
    %473 = vmatpush1.msra.mxu0 0.0
    %474 = vmatprep.subr.mxu0 0.0
    %475 = vmatpush1.msra.mxu0 0.0
    %476 = vmatprep.subr.mxu0 0.0
    %477 = vmatpush1.msra.mxu0 0.0
    %478 = vmatprep.subr.mxu0 0.0
    %479 = vmatpush1.msra.mxu0 0.0
    %480 = vmatprep.subr.mxu0 0.0
    %481 = vmatpush1.msra.mxu0 0.0
    %482 = vmatprep.subr.mxu0 0.0
    %483 = vmatpush1.msra.mxu0 0.0
    %484 = vmatprep.subr.mxu0 0.0
    %485 = vmatpush1.msra.mxu0 0.0
    %486 = vmatprep.mubr.f32.mxu0 0.0
    %487 = vmatmul.mubr.f32.gmra.mrb[0].mxu0 %v420
    %v488 = vpop.f32.mrb[0].mxu0
    %v489 = vadd.f32 0.0, %v488
    %v490 = vpop.f32.mrb[0].mxu0
    %v491 = vadd.f32 0.0, %v490
    %492 = vdwg.mxu0
    %493 = vmatprep.subr.mxu0 0.0
    %494 = vmatpush1.msra.mxu0 %v210
    %495 = vmatprep.subr.mxu0 0.0
    %496 = vmatpush1.msra.mxu0 %v213
    %497 = vmatprep.subr.mxu0 0.0
    %498 = vmatpush1.msra.mxu0 %v216
    %499 = vmatprep.subr.mxu0 0.0
    %500 = vmatpush1.msra.mxu0 %v219
    %501 = vmatprep.subr.mxu0 0.0
    %502 = vmatpush1.msra.mxu0 %v222
    %503 = vmatprep.subr.mxu0 0.0
    %504 = vmatpush1.msra.mxu0 %v225
    %505 = vmatprep.subr.mxu0 0.0
    %506 = vmatpush1.msra.mxu0 %v228
    %507 = vmatprep.subr.mxu0 0.0
    %508 = vmatpush1.msra.mxu0 %v231
    %509 = vmatprep.subr.mxu0 0.0
    %510 = vmatpush1.msra.mxu0 %v234
    %511 = vmatprep.subr.mxu0 0.0
    %512 = vmatpush1.msra.mxu0 %v237
    %513 = vmatprep.subr.mxu0 0.0
    %514 = vmatpush1.msra.mxu0 %v240
    %515 = vmatprep.subr.mxu0 0.0
    %516 = vmatpush1.msra.mxu0 %v243
    %517 = vmatprep.subr.mxu0 0.0
    %518 = vmatpush1.msra.mxu0 %v246
    %519 = vmatprep.subr.mxu0 0.0
    %520 = vmatpush1.msra.mxu0 %v249
    %521 = vmatprep.subr.mxu0 0.0
    %522 = vmatpush1.msra.mxu0 %v252
    %523 = vmatprep.subr.mxu0 0.0
    %524 = vmatpush1.msra.mxu0 %v255
    %525 = vmatprep.subr.mxu0 0.0
    %526 = vmatpush1.msra.mxu0 0.0
    %527 = vmatprep.subr.mxu0 0.0
    %528 = vmatpush1.msra.mxu0 0.0
    %529 = vmatprep.subr.mxu0 0.0
    %530 = vmatpush1.msra.mxu0 0.0
    %531 = vmatprep.subr.mxu0 0.0
    %532 = vmatpush1.msra.mxu0 0.0
    %533 = vmatprep.subr.mxu0 0.0
    %534 = vmatpush1.msra.mxu0 0.0
    %535 = vmatprep.subr.mxu0 0.0
    %536 = vmatpush1.msra.mxu0 0.0
    %537 = vmatprep.subr.mxu0 0.0
    %538 = vmatpush1.msra.mxu0 0.0
    %539 = vmatprep.subr.mxu0 0.0
    %540 = vmatpush1.msra.mxu0 0.0
    %541 = vmatprep.subr.mxu0 0.0
    %542 = vmatpush1.msra.mxu0 0.0
    %543 = vmatprep.subr.mxu0 0.0
    %544 = vmatpush1.msra.mxu0 0.0
    %545 = vmatprep.subr.mxu0 0.0
    %546 = vmatpush1.msra.mxu0 0.0
    %547 = vmatprep.subr.mxu0 0.0
    %548 = vmatpush1.msra.mxu0 0.0
    %549 = vmatprep.subr.mxu0 0.0
    %550 = vmatpush1.msra.mxu0 0.0
    %551 = vmatprep.subr.mxu0 0.0
    %552 = vmatpush1.msra.mxu0 0.0
    %553 = vmatprep.subr.mxu0 0.0
    %554 = vmatpush1.msra.mxu0 0.0
    %555 = vmatprep.subr.mxu0 0.0
    %556 = vmatpush1.msra.mxu0 0.0
    %557 = vmatprep.mubr.f32.mxu0 0.0
    %558 = vmatmul.mubr.f32.gmra.mrb[0].mxu0 %v420
    %v559 = vpop.f32.mrb[0].mxu0
    %v560 = vadd.f32 0.0, %v559
    %v561 = vpop.f32.mrb[0].mxu0
    %562 = vdwg.mxu0
    %v564 = vrot.slane %v489, 7
    %v566 = vadd.f32 %v134, %v564
    %v567 = vxor.u32 %v566, 2147483648
    %v568 = vmul.f32 %v567, 1.442695
    %v569 = vpow.pop %v568
    %v570 = vadd.f32 %v569, 1.0
    %v571 = vrcp.pop %v570
    %v572 = vmul.f32 1.0, %v571
    %v574 = vrot.slane %v491, 7
    %v576 = vadd.f32 %v136, %v574
    %v577 = vxor.u32 %v576, 2147483648
    %v578 = vmul.f32 %v577, 1.442695
    %v579 = vpow.pop %v578
    %v580 = vadd.f32 %v579, 1.0
    %v581 = vrcp.pop %v580
    %v582 = vmul.f32 1.0, %v581
    %v583 = vadd.f32 %v560, %v256
    %v585 = vrot.slane %v583, 7
    %v587 = vmul.f32 %v572, %v585
    %v588 = vadd.f32 %v205, %v587
    %v589 = vtanh.pop %v588
    %v590 = vsub.f32 1.0, %v582
    %v591 = vmul.f32 %v590, %v589
    %v593 = vrot.slane %v420, 7
    %v595 = vmul.f32 %v582, %v593
    %v596 = vadd.f32 %v591, %v595
    %597 = vst [vmem:[#allocation2] sm:$0x2] %v596
    %v599 = vrot.slane %v596, 1
    %601 = vmatprep.subr.mxu0 %v209
    %602 = vmatpush1.msra.mxu0 %v208
    %603 = vmatprep.subr.mxu0 %v212
    %604 = vmatpush1.msra.mxu0 %v211
    %605 = vmatprep.subr.mxu0 %v215
    %606 = vmatpush1.msra.mxu0 %v214
    %607 = vmatprep.subr.mxu0 %v218
    %608 = vmatpush1.msra.mxu0 %v217
    %609 = vmatprep.subr.mxu0 %v221
    %610 = vmatpush1.msra.mxu0 %v220
    %611 = vmatprep.subr.mxu0 %v224
    %612 = vmatpush1.msra.mxu0 %v223
    %613 = vmatprep.subr.mxu0 %v227
    %614 = vmatpush1.msra.mxu0 %v226
    %615 = vmatprep.subr.mxu0 %v230
    %616 = vmatpush1.msra.mxu0 %v229
    %617 = vmatprep.subr.mxu0 %v233
    %618 = vmatpush1.msra.mxu0 %v232
    %619 = vmatprep.subr.mxu0 %v236
    %620 = vmatpush1.msra.mxu0 %v235
    %621 = vmatprep.subr.mxu0 %v239
    %622 = vmatpush1.msra.mxu0 %v238
    %623 = vmatprep.subr.mxu0 %v242
    %624 = vmatpush1.msra.mxu0 %v241
    %625 = vmatprep.subr.mxu0 %v245
    %626 = vmatpush1.msra.mxu0 %v244
    %627 = vmatprep.subr.mxu0 %v248
    %628 = vmatpush1.msra.mxu0 %v247
    %629 = vmatprep.subr.mxu0 %v251
    %630 = vmatpush1.msra.mxu0 %v250
    %631 = vmatprep.subr.mxu0 %v254
    %632 = vmatpush1.msra.mxu0 %v253
    %633 = vmatprep.subr.mxu0 0.0
    %634 = vmatpush1.msra.mxu0 0.0
    %635 = vmatprep.subr.mxu0 0.0
    %636 = vmatpush1.msra.mxu0 0.0
    %637 = vmatprep.subr.mxu0 0.0
    %638 = vmatpush1.msra.mxu0 0.0
    %639 = vmatprep.subr.mxu0 0.0
    %640 = vmatpush1.msra.mxu0 0.0
    %641 = vmatprep.subr.mxu0 0.0
    %642 = vmatpush1.msra.mxu0 0.0
    %643 = vmatprep.subr.mxu0 0.0
    %644 = vmatpush1.msra.mxu0 0.0
    %645 = vmatprep.subr.mxu0 0.0
    %646 = vmatpush1.msra.mxu0 0.0
    %647 = vmatprep.subr.mxu0 0.0
    %648 = vmatpush1.msra.mxu0 0.0
    %649 = vmatprep.subr.mxu0 0.0
    %650 = vmatpush1.msra.mxu0 0.0
    %651 = vmatprep.subr.mxu0 0.0
    %652 = vmatpush1.msra.mxu0 0.0
    %653 = vmatprep.subr.mxu0 0.0
    %654 = vmatpush1.msra.mxu0 0.0
    %655 = vmatprep.subr.mxu0 0.0
    %656 = vmatpush1.msra.mxu0 0.0
    %657 = vmatprep.subr.mxu0 0.0
    %658 = vmatpush1.msra.mxu0 0.0
    %659 = vmatprep.subr.mxu0 0.0
    %660 = vmatpush1.msra.mxu0 0.0
    %661 = vmatprep.subr.mxu0 0.0
    %662 = vmatpush1.msra.mxu0 0.0
    %663 = vmatprep.subr.mxu0 0.0
    %664 = vmatpush1.msra.mxu0 0.0
    %665 = vmatprep.mubr.f32.mxu0 0.0
    %666 = vmatmul.mubr.f32.gmra.mrb[0].mxu0 %v599
    %v667 = vpop.f32.mrb[0].mxu0
    %v668 = vadd.f32 0.0, %v667
    %v669 = vpop.f32.mrb[0].mxu0
    %v670 = vadd.f32 0.0, %v669
    %671 = vdwg.mxu0
    %672 = vmatprep.subr.mxu0 0.0
    %673 = vmatpush1.msra.mxu0 %v210
    %674 = vmatprep.subr.mxu0 0.0
    %675 = vmatpush1.msra.mxu0 %v213
    %676 = vmatprep.subr.mxu0 0.0
    %677 = vmatpush1.msra.mxu0 %v216
    %678 = vmatprep.subr.mxu0 0.0
    %679 = vmatpush1.msra.mxu0 %v219
    %680 = vmatprep.subr.mxu0 0.0
    %681 = vmatpush1.msra.mxu0 %v222
    %682 = vmatprep.subr.mxu0 0.0
    %683 = vmatpush1.msra.mxu0 %v225
    %684 = vmatprep.subr.mxu0 0.0
    %685 = vmatpush1.msra.mxu0 %v228
    %686 = vmatprep.subr.mxu0 0.0
    %687 = vmatpush1.msra.mxu0 %v231
    %688 = vmatprep.subr.mxu0 0.0
    %689 = vmatpush1.msra.mxu0 %v234
    %690 = vmatprep.subr.mxu0 0.0
    %691 = vmatpush1.msra.mxu0 %v237
    %692 = vmatprep.subr.mxu0 0.0
    %693 = vmatpush1.msra.mxu0 %v240
    %694 = vmatprep.subr.mxu0 0.0
    %695 = vmatpush1.msra.mxu0 %v243
    %696 = vmatprep.subr.mxu0 0.0
    %697 = vmatpush1.msra.mxu0 %v246
    %698 = vmatprep.subr.mxu0 0.0
    %699 = vmatpush1.msra.mxu0 %v249
    %700 = vmatprep.subr.mxu0 0.0
    %701 = vmatpush1.msra.mxu0 %v252
    %702 = vmatprep.subr.mxu0 0.0
    %703 = vmatpush1.msra.mxu0 %v255
    %704 = vmatprep.subr.mxu0 0.0
    %705 = vmatpush1.msra.mxu0 0.0
    %706 = vmatprep.subr.mxu0 0.0
    %707 = vmatpush1.msra.mxu0 0.0
    %708 = vmatprep.subr.mxu0 0.0
    %709 = vmatpush1.msra.mxu0 0.0
    %710 = vmatprep.subr.mxu0 0.0
    %711 = vmatpush1.msra.mxu0 0.0
    %712 = vmatprep.subr.mxu0 0.0
    %713 = vmatpush1.msra.mxu0 0.0
    %714 = vmatprep.subr.mxu0 0.0
    %715 = vmatpush1.msra.mxu0 0.0
    %716 = vmatprep.subr.mxu0 0.0
    %717 = vmatpush1.msra.mxu0 0.0
    %718 = vmatprep.subr.mxu0 0.0
    %719 = vmatpush1.msra.mxu0 0.0
    %720 = vmatprep.subr.mxu0 0.0
    %721 = vmatpush1.msra.mxu0 0.0
    %722 = vmatprep.subr.mxu0 0.0
    %723 = vmatpush1.msra.mxu0 0.0
    %724 = vmatprep.subr.mxu0 0.0
    %725 = vmatpush1.msra.mxu0 0.0
    %726 = vmatprep.subr.mxu0 0.0
    %727 = vmatpush1.msra.mxu0 0.0
    %728 = vmatprep.subr.mxu0 0.0
    %729 = vmatpush1.msra.mxu0 0.0
    %730 = vmatprep.subr.mxu0 0.0
    %731 = vmatpush1.msra.mxu0 0.0
    %732 = vmatprep.subr.mxu0 0.0
    %733 = vmatpush1.msra.mxu0 0.0
    %734 = vmatprep.subr.mxu0 0.0
    %735 = vmatpush1.msra.mxu0 0.0
    %736 = vmatprep.mubr.f32.mxu0 0.0
    %737 = vmatmul.mubr.f32.gmra.mrb[0].mxu0 %v599
    %v738 = vpop.f32.mrb[0].mxu0
    %v739 = vadd.f32 0.0, %v738
    %v740 = vpop.f32.mrb[0].mxu0
    %741 = vdwg.mxu0
    %v743 = vrot.slane %v668, 6
    %v745 = vadd.f32 %v134, %v743
    %v746 = vxor.u32 %v745, 2147483648
    %v747 = vmul.f32 %v746, 1.442695
    %v748 = vpow.pop %v747
    %v749 = vadd.f32 %v748, 1.0
    %v750 = vrcp.pop %v749
    %v751 = vmul.f32 1.0, %v750
    %v753 = vrot.slane %v670, 6
    %v755 = vadd.f32 %v136, %v753
    %v756 = vxor.u32 %v755, 2147483648
    %v757 = vmul.f32 %v756, 1.442695
    %v758 = vpow.pop %v757
    %v759 = vadd.f32 %v758, 1.0
    %v760 = vrcp.pop %v759
    %v761 = vmul.f32 1.0, %v760
    %v762 = vadd.f32 %v739, %v256
    %v764 = vrot.slane %v762, 6
    %v766 = vmul.f32 %v751, %v764
    %v767 = vadd.f32 %v205, %v766
    %v768 = vtanh.pop %v767
    %v769 = vsub.f32 1.0, %v761
    %v770 = vmul.f32 %v769, %v768
    %v771 = vrot.slane %v596, 7
    %v773 = vmul.f32 %v761, %v771
    %v774 = vadd.f32 %v770, %v773
    %775 = vst [vmem:[#allocation2] sm:$0x4] %v774
    %v777 = vrot.slane %v774, 2
    %779 = vmatprep.subr.mxu0 %v209
    %780 = vmatpush1.msra.mxu0 %v208
    %781 = vmatprep.subr.mxu0 %v212
    %782 = vmatpush1.msra.mxu0 %v211
    %783 = vmatprep.subr.mxu0 %v215
    %784 = vmatpush1.msra.mxu0 %v214
    %785 = vmatprep.subr.mxu0 %v218
    %786 = vmatpush1.msra.mxu0 %v217
    %787 = vmatprep.subr.mxu0 %v221
    %788 = vmatpush1.msra.mxu0 %v220
    %789 = vmatprep.subr.mxu0 %v224
    %790 = vmatpush1.msra.mxu0 %v223
    %791 = vmatprep.subr.mxu0 %v227
    %792 = vmatpush1.msra.mxu0 %v226
    %793 = vmatprep.subr.mxu0 %v230
    %794 = vmatpush1.msra.mxu0 %v229
    %795 = vmatprep.subr.mxu0 %v233
    %796 = vmatpush1.msra.mxu0 %v232
    %797 = vmatprep.subr.mxu0 %v236
    %798 = vmatpush1.msra.mxu0 %v235
    %799 = vmatprep.subr.mxu0 %v239
    %800 = vmatpush1.msra.mxu0 %v238
    %801 = vmatprep.subr.mxu0 %v242
    %802 = vmatpush1.msra.mxu0 %v241
    %803 = vmatprep.subr.mxu0 %v245
    %804 = vmatpush1.msra.mxu0 %v244
    %805 = vmatprep.subr.mxu0 %v248
    %806 = vmatpush1.msra.mxu0 %v247
    %807 = vmatprep.subr.mxu0 %v251
    %808 = vmatpush1.msra.mxu0 %v250
    %809 = vmatprep.subr.mxu0 %v254
    %810 = vmatpush1.msra.mxu0 %v253
    %811 = vmatprep.subr.mxu0 0.0
    %812 = vmatpush1.msra.mxu0 0.0
    %813 = vmatprep.subr.mxu0 0.0
    %814 = vmatpush1.msra.mxu0 0.0
    %815 = vmatprep.subr.mxu0 0.0
    %816 = vmatpush1.msra.mxu0 0.0
    %817 = vmatprep.subr.mxu0 0.0
    %818 = vmatpush1.msra.mxu0 0.0
    %819 = vmatprep.subr.mxu0 0.0
    %820 = vmatpush1.msra.mxu0 0.0
    %821 = vmatprep.subr.mxu0 0.0
    %822 = vmatpush1.msra.mxu0 0.0
    %823 = vmatprep.subr.mxu0 0.0
    %824 = vmatpush1.msra.mxu0 0.0
    %825 = vmatprep.subr.mxu0 0.0
    %826 = vmatpush1.msra.mxu0 0.0
    %827 = vmatprep.subr.mxu0 0.0
    %828 = vmatpush1.msra.mxu0 0.0
    %829 = vmatprep.subr.mxu0 0.0
    %830 = vmatpush1.msra.mxu0 0.0
    %831 = vmatprep.subr.mxu0 0.0
    %832 = vmatpush1.msra.mxu0 0.0
    %833 = vmatprep.subr.mxu0 0.0
    %834 = vmatpush1.msra.mxu0 0.0
    %835 = vmatprep.subr.mxu0 0.0
    %836 = vmatpush1.msra.mxu0 0.0
    %837 = vmatprep.subr.mxu0 0.0
    %838 = vmatpush1.msra.mxu0 0.0
    %839 = vmatprep.subr.mxu0 0.0
    %840 = vmatpush1.msra.mxu0 0.0
    %841 = vmatprep.subr.mxu0 0.0
    %842 = vmatpush1.msra.mxu0 0.0
    %843 = vmatprep.mubr.f32.mxu0 0.0
    %844 = vmatmul.mubr.f32.gmra.mrb[0].mxu0 %v777
    %v845 = vpop.f32.mrb[0].mxu0
    %v846 = vadd.f32 0.0, %v845
    %v847 = vpop.f32.mrb[0].mxu0
    %v848 = vadd.f32 0.0, %v847
    %849 = vdwg.mxu0
    %850 = vmatprep.subr.mxu0 0.0
    %851 = vmatpush1.msra.mxu0 %v210
    %852 = vmatprep.subr.mxu0 0.0
    %853 = vmatpush1.msra.mxu0 %v213
    %854 = vmatprep.subr.mxu0 0.0
    %855 = vmatpush1.msra.mxu0 %v216
    %856 = vmatprep.subr.mxu0 0.0
    %857 = vmatpush1.msra.mxu0 %v219
    %858 = vmatprep.subr.mxu0 0.0
    %859 = vmatpush1.msra.mxu0 %v222
    %860 = vmatprep.subr.mxu0 0.0
    %861 = vmatpush1.msra.mxu0 %v225
    %862 = vmatprep.subr.mxu0 0.0
    %863 = vmatpush1.msra.mxu0 %v228
    %864 = vmatprep.subr.mxu0 0.0
    %865 = vmatpush1.msra.mxu0 %v231
    %866 = vmatprep.subr.mxu0 0.0
    %867 = vmatpush1.msra.mxu0 %v234
    %868 = vmatprep.subr.mxu0 0.0
    %869 = vmatpush1.msra.mxu0 %v237
    %870 = vmatprep.subr.mxu0 0.0
    %871 = vmatpush1.msra.mxu0 %v240
    %872 = vmatprep.subr.mxu0 0.0
    %873 = vmatpush1.msra.mxu0 %v243
    %874 = vmatprep.subr.mxu0 0.0
    %875 = vmatpush1.msra.mxu0 %v246
    %876 = vmatprep.subr.mxu0 0.0
    %877 = vmatpush1.msra.mxu0 %v249
    %878 = vmatprep.subr.mxu0 0.0
    %879 = vmatpush1.msra.mxu0 %v252
    %880 = vmatprep.subr.mxu0 0.0
    %881 = vmatpush1.msra.mxu0 %v255
    %882 = vmatprep.subr.mxu0 0.0
    %883 = vmatpush1.msra.mxu0 0.0
    %884 = vmatprep.subr.mxu0 0.0
    %885 = vmatpush1.msra.mxu0 0.0
    %886 = vmatprep.subr.mxu0 0.0
    %887 = vmatpush1.msra.mxu0 0.0
    %888 = vmatprep.subr.mxu0 0.0
    %889 = vmatpush1.msra.mxu0 0.0
    %890 = vmatprep.subr.mxu0 0.0
    %891 = vmatpush1.msra.mxu0 0.0
    %892 = vmatprep.subr.mxu0 0.0
    %893 = vmatpush1.msra.mxu0 0.0
    %894 = vmatprep.subr.mxu0 0.0
    %895 = vmatpush1.msra.mxu0 0.0
    %896 = vmatprep.subr.mxu0 0.0
    %897 = vmatpush1.msra.mxu0 0.0
    %898 = vmatprep.subr.mxu0 0.0
    %899 = vmatpush1.msra.mxu0 0.0
    %900 = vmatprep.subr.mxu0 0.0
    %901 = vmatpush1.msra.mxu0 0.0
    %902 = vmatprep.subr.mxu0 0.0
    %903 = vmatpush1.msra.mxu0 0.0
    %904 = vmatprep.subr.mxu0 0.0
    %905 = vmatpush1.msra.mxu0 0.0
    %906 = vmatprep.subr.mxu0 0.0
    %907 = vmatpush1.msra.mxu0 0.0
    %908 = vmatprep.subr.mxu0 0.0
    %909 = vmatpush1.msra.mxu0 0.0
    %910 = vmatprep.subr.mxu0 0.0
    %911 = vmatpush1.msra.mxu0 0.0
    %912 = vmatprep.subr.mxu0 0.0
    %913 = vmatpush1.msra.mxu0 0.0
    %914 = vmatprep.mubr.f32.mxu0 0.0
    %915 = vmatmul.mubr.f32.gmra.mrb[0].mxu0 %v777
    %v916 = vpop.f32.mrb[0].mxu0
    %v917 = vadd.f32 0.0, %v916
    %v918 = vpop.f32.mrb[0].mxu0
    %919 = vdwg.mxu0
    %v921 = vrot.slane %v846, 5
    %v923 = vadd.f32 %v134, %v921
    %v924 = vxor.u32 %v923, 2147483648
    %v925 = vmul.f32 %v924, 1.442695
    %v926 = vpow.pop %v925
    %v927 = vadd.f32 %v926, 1.0
    %v928 = vrcp.pop %v927
    %v929 = vmul.f32 1.0, %v928
    %v931 = vrot.slane %v848, 5
    %v933 = vadd.f32 %v136, %v931
    %v934 = vxor.u32 %v933, 2147483648
    %v935 = vmul.f32 %v934, 1.442695
    %v936 = vpow.pop %v935
    %v937 = vadd.f32 %v936, 1.0
    %v938 = vrcp.pop %v937
    %v939 = vmul.f32 1.0, %v938
    %v940 = vadd.f32 %v917, %v256
    %v942 = vrot.slane %v940, 5
    %v944 = vmul.f32 %v929, %v942
    %v945 = vadd.f32 %v205, %v944
    %v946 = vtanh.pop %v945
    %v947 = vsub.f32 1.0, %v939
    %v948 = vmul.f32 %v947, %v946
    %v949 = vrot.slane %v774, 7
    %v951 = vmul.f32 %v939, %v949
    %v952 = vadd.f32 %v948, %v951
    %953 = vst [vmem:[#allocation2] sm:$0x8] %v952
    %v955 = vrot.slane %v952, 3
    %957 = vmatprep.subr.mxu0 %v209
    %958 = vmatpush1.msra.mxu0 %v208
    %959 = vmatprep.subr.mxu0 %v212
    %960 = vmatpush1.msra.mxu0 %v211
    %961 = vmatprep.subr.mxu0 %v215
    %962 = vmatpush1.msra.mxu0 %v214
    %963 = vmatprep.subr.mxu0 %v218
    %964 = vmatpush1.msra.mxu0 %v217
    %965 = vmatprep.subr.mxu0 %v221
    %966 = vmatpush1.msra.mxu0 %v220
    %967 = vmatprep.subr.mxu0 %v224
    %968 = vmatpush1.msra.mxu0 %v223
    %969 = vmatprep.subr.mxu0 %v227
    %970 = vmatpush1.msra.mxu0 %v226
    %971 = vmatprep.subr.mxu0 %v230
    %972 = vmatpush1.msra.mxu0 %v229
    %973 = vmatprep.subr.mxu0 %v233
    %974 = vmatpush1.msra.mxu0 %v232
    %975 = vmatprep.subr.mxu0 %v236
    %976 = vmatpush1.msra.mxu0 %v235
    %977 = vmatprep.subr.mxu0 %v239
    %978 = vmatpush1.msra.mxu0 %v238
    %979 = vmatprep.subr.mxu0 %v242
    %980 = vmatpush1.msra.mxu0 %v241
    %981 = vmatprep.subr.mxu0 %v245
    %982 = vmatpush1.msra.mxu0 %v244
    %983 = vmatprep.subr.mxu0 %v248
    %984 = vmatpush1.msra.mxu0 %v247
    %985 = vmatprep.subr.mxu0 %v251
    %986 = vmatpush1.msra.mxu0 %v250
    %987 = vmatprep.subr.mxu0 %v254
    %988 = vmatpush1.msra.mxu0 %v253
    %989 = vmatprep.subr.mxu0 0.0
    %990 = vmatpush1.msra.mxu0 0.0
    %991 = vmatprep.subr.mxu0 0.0
    %992 = vmatpush1.msra.mxu0 0.0
    %993 = vmatprep.subr.mxu0 0.0
    %994 = vmatpush1.msra.mxu0 0.0
    %995 = vmatprep.subr.mxu0 0.0
    %996 = vmatpush1.msra.mxu0 0.0
    %997 = vmatprep.subr.mxu0 0.0
    %998 = vmatpush1.msra.mxu0 0.0
    %999 = vmatprep.subr.mxu0 0.0
    %1000 = vmatpush1.msra.mxu0 0.0
    %1001 = vmatprep.subr.mxu0 0.0
    %1002 = vmatpush1.msra.mxu0 0.0
    %1003 = vmatprep.subr.mxu0 0.0
    %1004 = vmatpush1.msra.mxu0 0.0
    %1005 = vmatprep.subr.mxu0 0.0
    %1006 = vmatpush1.msra.mxu0 0.0
    %1007 = vmatprep.subr.mxu0 0.0
    %1008 = vmatpush1.msra.mxu0 0.0
    %1009 = vmatprep.subr.mxu0 0.0
    %1010 = vmatpush1.msra.mxu0 0.0
    %1011 = vmatprep.subr.mxu0 0.0
    %1012 = vmatpush1.msra.mxu0 0.0
    %1013 = vmatprep.subr.mxu0 0.0
    %1014 = vmatpush1.msra.mxu0 0.0
    %1015 = vmatprep.subr.mxu0 0.0
    %1016 = vmatpush1.msra.mxu0 0.0
    %1017 = vmatprep.subr.mxu0 0.0
    %1018 = vmatpush1.msra.mxu0 0.0
    %1019 = vmatprep.subr.mxu0 0.0
    %1020 = vmatpush1.msra.mxu0 0.0
    %1021 = vmatprep.mubr.f32.mxu0 0.0
    %1022 = vmatmul.mubr.f32.gmra.mrb[0].mxu0 %v955
    %v1023 = vpop.f32.mrb[0].mxu0
    %v1024 = vadd.f32 0.0, %v1023
    %v1025 = vpop.f32.mrb[0].mxu0
    %v1026 = vadd.f32 0.0, %v1025
    %1027 = vdwg.mxu0
    %1028 = vmatprep.subr.mxu0 0.0
    %1029 = vmatpush1.msra.mxu0 %v210
    %1030 = vmatprep.subr.mxu0 0.0
    %1031 = vmatpush1.msra.mxu0 %v213
    %1032 = vmatprep.subr.mxu0 0.0
    %1033 = vmatpush1.msra.mxu0 %v216
    %1034 = vmatprep.subr.mxu0 0.0
    %1035 = vmatpush1.msra.mxu0 %v219
    %1036 = vmatprep.subr.mxu0 0.0
    %1037 = vmatpush1.msra.mxu0 %v222
    %1038 = vmatprep.subr.mxu0 0.0
    %1039 = vmatpush1.msra.mxu0 %v225
    %1040 = vmatprep.subr.mxu0 0.0
    %1041 = vmatpush1.msra.mxu0 %v228
    %1042 = vmatprep.subr.mxu0 0.0
    %1043 = vmatpush1.msra.mxu0 %v231
    %1044 = vmatprep.subr.mxu0 0.0
    %1045 = vmatpush1.msra.mxu0 %v234
    %1046 = vmatprep.subr.mxu0 0.0
    %1047 = vmatpush1.msra.mxu0 %v237
    %1048 = vmatprep.subr.mxu0 0.0
    %1049 = vmatpush1.msra.mxu0 %v240
    %1050 = vmatprep.subr.mxu0 0.0
    %1051 = vmatpush1.msra.mxu0 %v243
    %1052 = vmatprep.subr.mxu0 0.0
    %1053 = vmatpush1.msra.mxu0 %v246
    %1054 = vmatprep.subr.mxu0 0.0
    %1055 = vmatpush1.msra.mxu0 %v249
    %1056 = vmatprep.subr.mxu0 0.0
    %1057 = vmatpush1.msra.mxu0 %v252
    %1058 = vmatprep.subr.mxu0 0.0
    %1059 = vmatpush1.msra.mxu0 %v255
    %1060 = vmatprep.subr.mxu0 0.0
    %1061 = vmatpush1.msra.mxu0 0.0
    %1062 = vmatprep.subr.mxu0 0.0
    %1063 = vmatpush1.msra.mxu0 0.0
    %1064 = vmatprep.subr.mxu0 0.0
    %1065 = vmatpush1.msra.mxu0 0.0
    %1066 = vmatprep.subr.mxu0 0.0
    %1067 = vmatpush1.msra.mxu0 0.0
    %1068 = vmatprep.subr.mxu0 0.0
    %1069 = vmatpush1.msra.mxu0 0.0
    %1070 = vmatprep.subr.mxu0 0.0
    %1071 = vmatpush1.msra.mxu0 0.0
    %1072 = vmatprep.subr.mxu0 0.0
    %1073 = vmatpush1.msra.mxu0 0.0
    %1074 = vmatprep.subr.mxu0 0.0
    %1075 = vmatpush1.msra.mxu0 0.0
    %1076 = vmatprep.subr.mxu0 0.0
    %1077 = vmatpush1.msra.mxu0 0.0
    %1078 = vmatprep.subr.mxu0 0.0
    %1079 = vmatpush1.msra.mxu0 0.0
    %1080 = vmatprep.subr.mxu0 0.0
    %1081 = vmatpush1.msra.mxu0 0.0
    %1082 = vmatprep.subr.mxu0 0.0
    %1083 = vmatpush1.msra.mxu0 0.0
    %1084 = vmatprep.subr.mxu0 0.0
    %1085 = vmatpush1.msra.mxu0 0.0
    %1086 = vmatprep.subr.mxu0 0.0
    %1087 = vmatpush1.msra.mxu0 0.0
    %1088 = vmatprep.subr.mxu0 0.0
    %1089 = vmatpush1.msra.mxu0 0.0
    %1090 = vmatprep.subr.mxu0 0.0
    %1091 = vmatpush1.msra.mxu0 0.0
    %1092 = vmatprep.mubr.f32.mxu0 0.0
    %1093 = vmatmul.mubr.f32.gmra.mrb[0].mxu0 %v955
    %v1094 = vpop.f32.mrb[0].mxu0
    %v1095 = vadd.f32 0.0, %v1094
    %v1096 = vpop.f32.mrb[0].mxu0
    %1097 = vdwg.mxu0
    %v1099 = vrot.slane %v1024, 4
    %v1101 = vadd.f32 %v134, %v1099
    %v1102 = vxor.u32 %v1101, 2147483648
    %v1103 = vmul.f32 %v1102, 1.442695
    %v1104 = vpow.pop %v1103
    %v1105 = vadd.f32 %v1104, 1.0
    %v1106 = vrcp.pop %v1105
    %v1107 = vmul.f32 1.0, %v1106
    %v1109 = vrot.slane %v1026, 4
    %v1111 = vadd.f32 %v136, %v1109
    %v1112 = vxor.u32 %v1111, 2147483648
    %v1113 = vmul.f32 %v1112, 1.442695
    %v1114 = vpow.pop %v1113
    %v1115 = vadd.f32 %v1114, 1.0
    %v1116 = vrcp.pop %v1115
    %v1117 = vmul.f32 1.0, %v1116
    %v1118 = vadd.f32 %v1095, %v256
    %v1120 = vrot.slane %v1118, 4
    %v1122 = vmul.f32 %v1107, %v1120
    %v1123 = vadd.f32 %v205, %v1122
    %v1124 = vtanh.pop %v1123
    %v1125 = vsub.f32 1.0, %v1117
    %v1126 = vmul.f32 %v1125, %v1124
    %v1127 = vrot.slane %v952, 7
    %v1129 = vmul.f32 %v1117, %v1127
    %v1130 = vadd.f32 %v1126, %v1129
    %1131 = vst [vmem:[#allocation2] sm:$0x10] %v1130
    %v1133 = vrot.slane %v1130, 4
    %1135 = vmatprep.subr.mxu0 %v209
    %1136 = vmatpush1.msra.mxu0 %v208
    %1137 = vmatprep.subr.mxu0 %v212
    %1138 = vmatpush1.msra.mxu0 %v211
    %1139 = vmatprep.subr.mxu0 %v215
    %1140 = vmatpush1.msra.mxu0 %v214
    %1141 = vmatprep.subr.mxu0 %v218
    %1142 = vmatpush1.msra.mxu0 %v217
    %1143 = vmatprep.subr.mxu0 %v221
    %1144 = vmatpush1.msra.mxu0 %v220
    %1145 = vmatprep.subr.mxu0 %v224
    %1146 = vmatpush1.msra.mxu0 %v223
    %1147 = vmatprep.subr.mxu0 %v227
    %1148 = vmatpush1.msra.mxu0 %v226
    %1149 = vmatprep.subr.mxu0 %v230
    %1150 = vmatpush1.msra.mxu0 %v229
    %1151 = vmatprep.subr.mxu0 %v233
    %1152 = vmatpush1.msra.mxu0 %v232
    %1153 = vmatprep.subr.mxu0 %v236
    %1154 = vmatpush1.msra.mxu0 %v235
    %1155 = vmatprep.subr.mxu0 %v239
    %1156 = vmatpush1.msra.mxu0 %v238
    %1157 = vmatprep.subr.mxu0 %v242
    %1158 = vmatpush1.msra.mxu0 %v241
    %1159 = vmatprep.subr.mxu0 %v245
    %1160 = vmatpush1.msra.mxu0 %v244
    %1161 = vmatprep.subr.mxu0 %v248
    %1162 = vmatpush1.msra.mxu0 %v247
    %1163 = vmatprep.subr.mxu0 %v251
    %1164 = vmatpush1.msra.mxu0 %v250
    %1165 = vmatprep.subr.mxu0 %v254
    %1166 = vmatpush1.msra.mxu0 %v253
    %1167 = vmatprep.subr.mxu0 0.0
    %1168 = vmatpush1.msra.mxu0 0.0
    %1169 = vmatprep.subr.mxu0 0.0
    %1170 = vmatpush1.msra.mxu0 0.0
    %1171 = vmatprep.subr.mxu0 0.0
    %1172 = vmatpush1.msra.mxu0 0.0
    %1173 = vmatprep.subr.mxu0 0.0
    %1174 = vmatpush1.msra.mxu0 0.0
    %1175 = vmatprep.subr.mxu0 0.0
    %1176 = vmatpush1.msra.mxu0 0.0
    %1177 = vmatprep.subr.mxu0 0.0
    %1178 = vmatpush1.msra.mxu0 0.0
    %1179 = vmatprep.subr.mxu0 0.0
    %1180 = vmatpush1.msra.mxu0 0.0
    %1181 = vmatprep.subr.mxu0 0.0
    %1182 = vmatpush1.msra.mxu0 0.0
    %1183 = vmatprep.subr.mxu0 0.0
    %1184 = vmatpush1.msra.mxu0 0.0
    %1185 = vmatprep.subr.mxu0 0.0
    %1186 = vmatpush1.msra.mxu0 0.0
    %1187 = vmatprep.subr.mxu0 0.0
    %1188 = vmatpush1.msra.mxu0 0.0
    %1189 = vmatprep.subr.mxu0 0.0
    %1190 = vmatpush1.msra.mxu0 0.0
    %1191 = vmatprep.subr.mxu0 0.0
    %1192 = vmatpush1.msra.mxu0 0.0
    %1193 = vmatprep.subr.mxu0 0.0
    %1194 = vmatpush1.msra.mxu0 0.0
    %1195 = vmatprep.subr.mxu0 0.0
    %1196 = vmatpush1.msra.mxu0 0.0
    %1197 = vmatprep.subr.mxu0 0.0
    %1198 = vmatpush1.msra.mxu0 0.0
    %1199 = vmatprep.mubr.f32.mxu0 0.0
    %1200 = vmatmul.mubr.f32.gmra.mrb[0].mxu0 %v1133
    %v1201 = vpop.f32.mrb[0].mxu0
    %v1202 = vadd.f32 0.0, %v1201
    %v1203 = vpop.f32.mrb[0].mxu0
    %v1204 = vadd.f32 0.0, %v1203
    %1205 = vdwg.mxu0
    %1206 = vmatprep.subr.mxu0 0.0
    %1207 = vmatpush1.msra.mxu0 %v210
    %1208 = vmatprep.subr.mxu0 0.0
    %1209 = vmatpush1.msra.mxu0 %v213
    %1210 = vmatprep.subr.mxu0 0.0
    %1211 = vmatpush1.msra.mxu0 %v216
    %1212 = vmatprep.subr.mxu0 0.0
    %1213 = vmatpush1.msra.mxu0 %v219
    %1214 = vmatprep.subr.mxu0 0.0
    %1215 = vmatpush1.msra.mxu0 %v222
    %1216 = vmatprep.subr.mxu0 0.0
    %1217 = vmatpush1.msra.mxu0 %v225
    %1218 = vmatprep.subr.mxu0 0.0
    %1219 = vmatpush1.msra.mxu0 %v228
    %1220 = vmatprep.subr.mxu0 0.0
    %1221 = vmatpush1.msra.mxu0 %v231
    %1222 = vmatprep.subr.mxu0 0.0
    %1223 = vmatpush1.msra.mxu0 %v234
    %1224 = vmatprep.subr.mxu0 0.0
    %1225 = vmatpush1.msra.mxu0 %v237
    %1226 = vmatprep.subr.mxu0 0.0
    %1227 = vmatpush1.msra.mxu0 %v240
    %1228 = vmatprep.subr.mxu0 0.0
    %1229 = vmatpush1.msra.mxu0 %v243
    %1230 = vmatprep.subr.mxu0 0.0
    %1231 = vmatpush1.msra.mxu0 %v246
    %1232 = vmatprep.subr.mxu0 0.0
    %1233 = vmatpush1.msra.mxu0 %v249
    %1234 = vmatprep.subr.mxu0 0.0
    %1235 = vmatpush1.msra.mxu0 %v252
    %1236 = vmatprep.subr.mxu0 0.0
    %1237 = vmatpush1.msra.mxu0 %v255
    %1238 = vmatprep.subr.mxu0 0.0
    %1239 = vmatpush1.msra.mxu0 0.0
    %1240 = vmatprep.subr.mxu0 0.0
    %1241 = vmatpush1.msra.mxu0 0.0
    %1242 = vmatprep.subr.mxu0 0.0
    %1243 = vmatpush1.msra.mxu0 0.0
    %1244 = vmatprep.subr.mxu0 0.0
    %1245 = vmatpush1.msra.mxu0 0.0
    %1246 = vmatprep.subr.mxu0 0.0
    %1247 = vmatpush1.msra.mxu0 0.0
    %1248 = vmatprep.subr.mxu0 0.0
    %1249 = vmatpush1.msra.mxu0 0.0
    %1250 = vmatprep.subr.mxu0 0.0
    %1251 = vmatpush1.msra.mxu0 0.0
    %1252 = vmatprep.subr.mxu0 0.0
    %1253 = vmatpush1.msra.mxu0 0.0
    %1254 = vmatprep.subr.mxu0 0.0
    %1255 = vmatpush1.msra.mxu0 0.0
    %1256 = vmatprep.subr.mxu0 0.0
    %1257 = vmatpush1.msra.mxu0 0.0
    %1258 = vmatprep.subr.mxu0 0.0
    %1259 = vmatpush1.msra.mxu0 0.0
    %1260 = vmatprep.subr.mxu0 0.0
    %1261 = vmatpush1.msra.mxu0 0.0
    %1262 = vmatprep.subr.mxu0 0.0
    %1263 = vmatpush1.msra.mxu0 0.0
    %1264 = vmatprep.subr.mxu0 0.0
    %1265 = vmatpush1.msra.mxu0 0.0
    %1266 = vmatprep.subr.mxu0 0.0
    %1267 = vmatpush1.msra.mxu0 0.0
    %1268 = vmatprep.subr.mxu0 0.0
    %1269 = vmatpush1.msra.mxu0 0.0
    %1270 = vmatprep.mubr.f32.mxu0 0.0
    %1271 = vmatmul.mubr.f32.gmra.mrb[0].mxu0 %v1133
    %v1272 = vpop.f32.mrb[0].mxu0
    %v1273 = vadd.f32 0.0, %v1272
    %v1274 = vpop.f32.mrb[0].mxu0
    %1275 = vdwg.mxu0
    %v1277 = vrot.slane %v1202, 3
    %v1279 = vadd.f32 %v134, %v1277
    %v1280 = vxor.u32 %v1279, 2147483648
    %v1281 = vmul.f32 %v1280, 1.442695
    %v1282 = vpow.pop %v1281
    %v1283 = vadd.f32 %v1282, 1.0
    %v1284 = vrcp.pop %v1283
    %v1285 = vmul.f32 1.0, %v1284
    %v1287 = vrot.slane %v1204, 3
    %v1289 = vadd.f32 %v136, %v1287
    %v1290 = vxor.u32 %v1289, 2147483648
    %v1291 = vmul.f32 %v1290, 1.442695
    %v1292 = vpow.pop %v1291
    %v1293 = vadd.f32 %v1292, 1.0
    %v1294 = vrcp.pop %v1293
    %v1295 = vmul.f32 1.0, %v1294
    %v1296 = vadd.f32 %v1273, %v256
    %v1298 = vrot.slane %v1296, 3
    %v1300 = vmul.f32 %v1285, %v1298
    %v1301 = vadd.f32 %v205, %v1300
    %v1302 = vtanh.pop %v1301
    %v1303 = vsub.f32 1.0, %v1295
    %v1304 = vmul.f32 %v1303, %v1302
    %v1305 = vrot.slane %v1130, 7
    %v1307 = vmul.f32 %v1295, %v1305
    %v1308 = vadd.f32 %v1304, %v1307
    %1309 = vst [vmem:[#allocation2] sm:$0x20] %v1308
    %v1311 = vrot.slane %v1308, 5
    %1313 = vmatprep.subr.mxu0 %v209
    %1314 = vmatpush1.msra.mxu0 %v208
    %1315 = vmatprep.subr.mxu0 %v212
    %1316 = vmatpush1.msra.mxu0 %v211
    %1317 = vmatprep.subr.mxu0 %v215
    %1318 = vmatpush1.msra.mxu0 %v214
    %1319 = vmatprep.subr.mxu0 %v218
    %1320 = vmatpush1.msra.mxu0 %v217
    %1321 = vmatprep.subr.mxu0 %v221
    %1322 = vmatpush1.msra.mxu0 %v220
    %1323 = vmatprep.subr.mxu0 %v224
    %1324 = vmatpush1.msra.mxu0 %v223
    %1325 = vmatprep.subr.mxu0 %v227
    %1326 = vmatpush1.msra.mxu0 %v226
    %1327 = vmatprep.subr.mxu0 %v230
    %1328 = vmatpush1.msra.mxu0 %v229
    %1329 = vmatprep.subr.mxu0 %v233
    %1330 = vmatpush1.msra.mxu0 %v232
    %1331 = vmatprep.subr.mxu0 %v236
    %1332 = vmatpush1.msra.mxu0 %v235
    %1333 = vmatprep.subr.mxu0 %v239
    %1334 = vmatpush1.msra.mxu0 %v238
    %1335 = vmatprep.subr.mxu0 %v242
    %1336 = vmatpush1.msra.mxu0 %v241
    %1337 = vmatprep.subr.mxu0 %v245
    %1338 = vmatpush1.msra.mxu0 %v244
    %1339 = vmatprep.subr.mxu0 %v248
    %1340 = vmatpush1.msra.mxu0 %v247
    %1341 = vmatprep.subr.mxu0 %v251
    %1342 = vmatpush1.msra.mxu0 %v250
    %1343 = vmatprep.subr.mxu0 %v254
    %1344 = vmatpush1.msra.mxu0 %v253
    %1345 = vmatprep.subr.mxu0 0.0
    %1346 = vmatpush1.msra.mxu0 0.0
    %1347 = vmatprep.subr.mxu0 0.0
    %1348 = vmatpush1.msra.mxu0 0.0
    %1349 = vmatprep.subr.mxu0 0.0
    %1350 = vmatpush1.msra.mxu0 0.0
    %1351 = vmatprep.subr.mxu0 0.0
    %1352 = vmatpush1.msra.mxu0 0.0
    %1353 = vmatprep.subr.mxu0 0.0
    %1354 = vmatpush1.msra.mxu0 0.0
    %1355 = vmatprep.subr.mxu0 0.0
    %1356 = vmatpush1.msra.mxu0 0.0
    %1357 = vmatprep.subr.mxu0 0.0
    %1358 = vmatpush1.msra.mxu0 0.0
    %1359 = vmatprep.subr.mxu0 0.0
    %1360 = vmatpush1.msra.mxu0 0.0
    %1361 = vmatprep.subr.mxu0 0.0
    %1362 = vmatpush1.msra.mxu0 0.0
    %1363 = vmatprep.subr.mxu0 0.0
    %1364 = vmatpush1.msra.mxu0 0.0
    %1365 = vmatprep.subr.mxu0 0.0
    %1366 = vmatpush1.msra.mxu0 0.0
    %1367 = vmatprep.subr.mxu0 0.0
    %1368 = vmatpush1.msra.mxu0 0.0
    %1369 = vmatprep.subr.mxu0 0.0
    %1370 = vmatpush1.msra.mxu0 0.0
    %1371 = vmatprep.subr.mxu0 0.0
    %1372 = vmatpush1.msra.mxu0 0.0
    %1373 = vmatprep.subr.mxu0 0.0
    %1374 = vmatpush1.msra.mxu0 0.0
    %1375 = vmatprep.subr.mxu0 0.0
    %1376 = vmatpush1.msra.mxu0 0.0
    %1377 = vmatprep.mubr.f32.mxu0 0.0
    %1378 = vmatmul.mubr.f32.gmra.mrb[0].mxu0 %v1311
    %v1379 = vpop.f32.mrb[0].mxu0
    %v1380 = vadd.f32 0.0, %v1379
    %v1381 = vpop.f32.mrb[0].mxu0
    %v1382 = vadd.f32 0.0, %v1381
    %1383 = vdwg.mxu0
    %1384 = vmatprep.subr.mxu0 0.0
    %1385 = vmatpush1.msra.mxu0 %v210
    %1386 = vmatprep.subr.mxu0 0.0
    %1387 = vmatpush1.msra.mxu0 %v213
    %1388 = vmatprep.subr.mxu0 0.0
    %1389 = vmatpush1.msra.mxu0 %v216
    %1390 = vmatprep.subr.mxu0 0.0
    %1391 = vmatpush1.msra.mxu0 %v219
    %1392 = vmatprep.subr.mxu0 0.0
    %1393 = vmatpush1.msra.mxu0 %v222
    %1394 = vmatprep.subr.mxu0 0.0
    %1395 = vmatpush1.msra.mxu0 %v225
    %1396 = vmatprep.subr.mxu0 0.0
    %1397 = vmatpush1.msra.mxu0 %v228
    %1398 = vmatprep.subr.mxu0 0.0
    %1399 = vmatpush1.msra.mxu0 %v231
    %1400 = vmatprep.subr.mxu0 0.0
    %1401 = vmatpush1.msra.mxu0 %v234
    %1402 = vmatprep.subr.mxu0 0.0
    %1403 = vmatpush1.msra.mxu0 %v237
    %1404 = vmatprep.subr.mxu0 0.0
    %1405 = vmatpush1.msra.mxu0 %v240
    %1406 = vmatprep.subr.mxu0 0.0
    %1407 = vmatpush1.msra.mxu0 %v243
    %1408 = vmatprep.subr.mxu0 0.0
    %1409 = vmatpush1.msra.mxu0 %v246
    %1410 = vmatprep.subr.mxu0 0.0
    %1411 = vmatpush1.msra.mxu0 %v249
    %1412 = vmatprep.subr.mxu0 0.0
    %1413 = vmatpush1.msra.mxu0 %v252
    %1414 = vmatprep.subr.mxu0 0.0
    %1415 = vmatpush1.msra.mxu0 %v255
    %1416 = vmatprep.subr.mxu0 0.0
    %1417 = vmatpush1.msra.mxu0 0.0
    %1418 = vmatprep.subr.mxu0 0.0
    %1419 = vmatpush1.msra.mxu0 0.0
    %1420 = vmatprep.subr.mxu0 0.0
    %1421 = vmatpush1.msra.mxu0 0.0
    %1422 = vmatprep.subr.mxu0 0.0
    %1423 = vmatpush1.msra.mxu0 0.0
    %1424 = vmatprep.subr.mxu0 0.0
    %1425 = vmatpush1.msra.mxu0 0.0
    %1426 = vmatprep.subr.mxu0 0.0
    %1427 = vmatpush1.msra.mxu0 0.0
    %1428 = vmatprep.subr.mxu0 0.0
    %1429 = vmatpush1.msra.mxu0 0.0
    %1430 = vmatprep.subr.mxu0 0.0
    %1431 = vmatpush1.msra.mxu0 0.0
    %1432 = vmatprep.subr.mxu0 0.0
    %1433 = vmatpush1.msra.mxu0 0.0
    %1434 = vmatprep.subr.mxu0 0.0
    %1435 = vmatpush1.msra.mxu0 0.0
    %1436 = vmatprep.subr.mxu0 0.0
    %1437 = vmatpush1.msra.mxu0 0.0
    %1438 = vmatprep.subr.mxu0 0.0
    %1439 = vmatpush1.msra.mxu0 0.0
    %1440 = vmatprep.subr.mxu0 0.0
    %1441 = vmatpush1.msra.mxu0 0.0
    %1442 = vmatprep.subr.mxu0 0.0
    %1443 = vmatpush1.msra.mxu0 0.0
    %1444 = vmatprep.subr.mxu0 0.0
    %1445 = vmatpush1.msra.mxu0 0.0
    %1446 = vmatprep.subr.mxu0 0.0
    %1447 = vmatpush1.msra.mxu0 0.0
    %1448 = vmatprep.mubr.f32.mxu0 0.0
    %1449 = vmatmul.mubr.f32.gmra.mrb[0].mxu0 %v1311
    %v1450 = vpop.f32.mrb[0].mxu0
    %v1451 = vadd.f32 0.0, %v1450
    %v1452 = vpop.f32.mrb[0].mxu0
    %1453 = vdwg.mxu0
    %v1455 = vrot.slane %v1380, 2
    %v1457 = vadd.f32 %v134, %v1455
    %v1458 = vxor.u32 %v1457, 2147483648
    %v1459 = vmul.f32 %v1458, 1.442695
    %v1460 = vpow.pop %v1459
    %v1461 = vadd.f32 %v1460, 1.0
    %v1462 = vrcp.pop %v1461
    %v1463 = vmul.f32 1.0, %v1462
    %v1465 = vrot.slane %v1382, 2
    %v1467 = vadd.f32 %v136, %v1465
    %v1468 = vxor.u32 %v1467, 2147483648
    %v1469 = vmul.f32 %v1468, 1.442695
    %v1470 = vpow.pop %v1469
    %v1471 = vadd.f32 %v1470, 1.0
    %v1472 = vrcp.pop %v1471
    %v1473 = vmul.f32 1.0, %v1472
    %v1474 = vadd.f32 %v1451, %v256
    %v1476 = vrot.slane %v1474, 2
    %v1478 = vmul.f32 %v1463, %v1476
    %v1479 = vadd.f32 %v205, %v1478
    %v1480 = vtanh.pop %v1479
    %v1481 = vsub.f32 1.0, %v1473
    %v1482 = vmul.f32 %v1481, %v1480
    %v1483 = vrot.slane %v1308, 7
    %v1485 = vmul.f32 %v1473, %v1483
    %v1486 = vadd.f32 %v1482, %v1485
    %1487 = vst [vmem:[#allocation2] sm:$0x40] %v1486
    %v1489 = vrot.slane %v1486, 6
    %1491 = vmatprep.subr.mxu0 %v209
    %1492 = vmatpush1.msra.mxu0 %v208
    %1493 = vmatprep.subr.mxu0 %v212
    %1494 = vmatpush1.msra.mxu0 %v211
    %1495 = vmatprep.subr.mxu0 %v215
    %1496 = vmatpush1.msra.mxu0 %v214
    %1497 = vmatprep.subr.mxu0 %v218
    %1498 = vmatpush1.msra.mxu0 %v217
    %1499 = vmatprep.subr.mxu0 %v221
    %1500 = vmatpush1.msra.mxu0 %v220
    %1501 = vmatprep.subr.mxu0 %v224
    %1502 = vmatpush1.msra.mxu0 %v223
    %1503 = vmatprep.subr.mxu0 %v227
    %1504 = vmatpush1.msra.mxu0 %v226
    %1505 = vmatprep.subr.mxu0 %v230
    %1506 = vmatpush1.msra.mxu0 %v229
    %1507 = vmatprep.subr.mxu0 %v233
    %1508 = vmatpush1.msra.mxu0 %v232
    %1509 = vmatprep.subr.mxu0 %v236
    %1510 = vmatpush1.msra.mxu0 %v235
    %1511 = vmatprep.subr.mxu0 %v239
    %1512 = vmatpush1.msra.mxu0 %v238
    %1513 = vmatprep.subr.mxu0 %v242
    %1514 = vmatpush1.msra.mxu0 %v241
    %1515 = vmatprep.subr.mxu0 %v245
    %1516 = vmatpush1.msra.mxu0 %v244
    %1517 = vmatprep.subr.mxu0 %v248
    %1518 = vmatpush1.msra.mxu0 %v247
    %1519 = vmatprep.subr.mxu0 %v251
    %1520 = vmatpush1.msra.mxu0 %v250
    %1521 = vmatprep.subr.mxu0 %v254
    %1522 = vmatpush1.msra.mxu0 %v253
    %1523 = vmatprep.subr.mxu0 0.0
    %1524 = vmatpush1.msra.mxu0 0.0
    %1525 = vmatprep.subr.mxu0 0.0
    %1526 = vmatpush1.msra.mxu0 0.0
    %1527 = vmatprep.subr.mxu0 0.0
    %1528 = vmatpush1.msra.mxu0 0.0
    %1529 = vmatprep.subr.mxu0 0.0
    %1530 = vmatpush1.msra.mxu0 0.0
    %1531 = vmatprep.subr.mxu0 0.0
    %1532 = vmatpush1.msra.mxu0 0.0
    %1533 = vmatprep.subr.mxu0 0.0
    %1534 = vmatpush1.msra.mxu0 0.0
    %1535 = vmatprep.subr.mxu0 0.0
    %1536 = vmatpush1.msra.mxu0 0.0
    %1537 = vmatprep.subr.mxu0 0.0
    %1538 = vmatpush1.msra.mxu0 0.0
    %1539 = vmatprep.subr.mxu0 0.0
    %1540 = vmatpush1.msra.mxu0 0.0
    %1541 = vmatprep.subr.mxu0 0.0
    %1542 = vmatpush1.msra.mxu0 0.0
    %1543 = vmatprep.subr.mxu0 0.0
    %1544 = vmatpush1.msra.mxu0 0.0
    %1545 = vmatprep.subr.mxu0 0.0
    %1546 = vmatpush1.msra.mxu0 0.0
    %1547 = vmatprep.subr.mxu0 0.0
    %1548 = vmatpush1.msra.mxu0 0.0
    %1549 = vmatprep.subr.mxu0 0.0
    %1550 = vmatpush1.msra.mxu0 0.0
    %1551 = vmatprep.subr.mxu0 0.0
    %1552 = vmatpush1.msra.mxu0 0.0
    %1553 = vmatprep.subr.mxu0 0.0
    %1554 = vmatpush1.msra.mxu0 0.0
    %1555 = vmatprep.mubr.f32.mxu0 0.0
    %1556 = vmatmul.mubr.f32.gmra.mrb[0].mxu0 %v1489
    %v1557 = vpop.f32.mrb[0].mxu0
    %v1558 = vadd.f32 0.0, %v1557
    %v1559 = vpop.f32.mrb[0].mxu0
    %v1560 = vadd.f32 0.0, %v1559
    %1561 = vdwg.mxu0
    %1562 = vmatprep.subr.mxu0 0.0
    %1563 = vmatpush1.msra.mxu0 %v210
    %1564 = vmatprep.subr.mxu0 0.0
    %1565 = vmatpush1.msra.mxu0 %v213
    %1566 = vmatprep.subr.mxu0 0.0
    %1567 = vmatpush1.msra.mxu0 %v216
    %1568 = vmatprep.subr.mxu0 0.0
    %1569 = vmatpush1.msra.mxu0 %v219
    %1570 = vmatprep.subr.mxu0 0.0
    %1571 = vmatpush1.msra.mxu0 %v222
    %1572 = vmatprep.subr.mxu0 0.0
    %1573 = vmatpush1.msra.mxu0 %v225
    %1574 = vmatprep.subr.mxu0 0.0
    %1575 = vmatpush1.msra.mxu0 %v228
    %1576 = vmatprep.subr.mxu0 0.0
    %1577 = vmatpush1.msra.mxu0 %v231
    %1578 = vmatprep.subr.mxu0 0.0
    %1579 = vmatpush1.msra.mxu0 %v234
    %1580 = vmatprep.subr.mxu0 0.0
    %1581 = vmatpush1.msra.mxu0 %v237
    %1582 = vmatprep.subr.mxu0 0.0
    %1583 = vmatpush1.msra.mxu0 %v240
    %1584 = vmatprep.subr.mxu0 0.0
    %1585 = vmatpush1.msra.mxu0 %v243
    %1586 = vmatprep.subr.mxu0 0.0
    %1587 = vmatpush1.msra.mxu0 %v246
    %1588 = vmatprep.subr.mxu0 0.0
    %1589 = vmatpush1.msra.mxu0 %v249
    %1590 = vmatprep.subr.mxu0 0.0
    %1591 = vmatpush1.msra.mxu0 %v252
    %1592 = vmatprep.subr.mxu0 0.0
    %1593 = vmatpush1.msra.mxu0 %v255
    %1594 = vmatprep.subr.mxu0 0.0
    %1595 = vmatpush1.msra.mxu0 0.0
    %1596 = vmatprep.subr.mxu0 0.0
    %1597 = vmatpush1.msra.mxu0 0.0
    %1598 = vmatprep.subr.mxu0 0.0
    %1599 = vmatpush1.msra.mxu0 0.0
    %1600 = vmatprep.subr.mxu0 0.0
    %1601 = vmatpush1.msra.mxu0 0.0
    %1602 = vmatprep.subr.mxu0 0.0
    %1603 = vmatpush1.msra.mxu0 0.0
    %1604 = vmatprep.subr.mxu0 0.0
    %1605 = vmatpush1.msra.mxu0 0.0
    %1606 = vmatprep.subr.mxu0 0.0
    %1607 = vmatpush1.msra.mxu0 0.0
    %1608 = vmatprep.subr.mxu0 0.0
    %1609 = vmatpush1.msra.mxu0 0.0
    %1610 = vmatprep.subr.mxu0 0.0
    %1611 = vmatpush1.msra.mxu0 0.0
    %1612 = vmatprep.subr.mxu0 0.0
    %1613 = vmatpush1.msra.mxu0 0.0
    %1614 = vmatprep.subr.mxu0 0.0
    %1615 = vmatpush1.msra.mxu0 0.0
    %1616 = vmatprep.subr.mxu0 0.0
    %1617 = vmatpush1.msra.mxu0 0.0
    %1618 = vmatprep.subr.mxu0 0.0
    %1619 = vmatpush1.msra.mxu0 0.0
    %1620 = vmatprep.subr.mxu0 0.0
    %1621 = vmatpush1.msra.mxu0 0.0
    %1622 = vmatprep.subr.mxu0 0.0
    %1623 = vmatpush1.msra.mxu0 0.0
    %1624 = vmatprep.subr.mxu0 0.0
    %1625 = vmatpush1.msra.mxu0 0.0
    %1626 = vmatprep.mubr.f32.mxu0 0.0
    %1627 = vmatmul.mubr.f32.gmra.mrb[0].mxu0 %v1489
    %v1628 = vpop.f32.mrb[0].mxu0
    %v1629 = vadd.f32 0.0, %v1628
    %v1630 = vpop.f32.mrb[0].mxu0
    %1631 = vdwg.mxu0
    %v1633 = vrot.slane %v1558, 1
    %v1635 = vadd.f32 %v134, %v1633
    %v1636 = vxor.u32 %v1635, 2147483648
    %v1637 = vmul.f32 %v1636, 1.442695
    %v1638 = vpow.pop %v1637
    %v1639 = vadd.f32 %v1638, 1.0
    %v1640 = vrcp.pop %v1639
    %v1641 = vmul.f32 1.0, %v1640
    %v1643 = vrot.slane %v1560, 1
    %v1645 = vadd.f32 %v136, %v1643
    %v1646 = vxor.u32 %v1645, 2147483648
    %v1647 = vmul.f32 %v1646, 1.442695
    %v1648 = vpow.pop %v1647
    %v1649 = vadd.f32 %v1648, 1.0
    %v1650 = vrcp.pop %v1649
    %v1651 = vmul.f32 1.0, %v1650
    %v1652 = vadd.f32 %v1629, %v256
    %v1654 = vrot.slane %v1652, 1
    %v1656 = vmul.f32 %v1641, %v1654
    %v1657 = vadd.f32 %v205, %v1656
    %v1658 = vtanh.pop %v1657
    %v1659 = vsub.f32 1.0, %v1651
    %v1660 = vmul.f32 %v1659, %v1658
    %v1661 = vrot.slane %v1486, 7
    %v1663 = vmul.f32 %v1651, %v1661
    %v1664 = vadd.f32 %v1660, %v1663
    %1665 = vst [vmem:[#allocation2] sm:$0x80] %v1664
    %1666 = vst [vmem:[#allocation5 - $0x7] sm:$0x80] %v1664
    %v1667 = vld [vmem:[#allocation2] sm:$0xff]
    %v1668 = vld [vmem:[%s6] sm:$0xff]
    %v1669 = vld [vmem:[%s6 + $0x8] sm:$0xff]
    %v1670 = vld [vmem:[%s6 + $0x10] sm:$0xff]
    %v1671 = vld [vmem:[%s6 + $0x18] sm:$0xff]
    %v1672 = vld [vmem:[%s6 + $0x20] sm:$0xff]
    %v1673 = vld [vmem:[%s6 + $0x28] sm:$0xff]
    %v1674 = vld [vmem:[%s6 + $0x30] sm:$0xff]
    %v1675 = vld [vmem:[%s6 + $0x38] sm:$0xff]
    %v1676 = vld [vmem:[%s6 + $0x40] sm:$0xff]
    %v1677 = vld [vmem:[%s6 + $0x48] sm:$0xff]
    %v1678 = vld [vmem:[%s6 + $0x50] sm:$0xff]
    %v1679 = vld [vmem:[%s6 + $0x58] sm:$0xff]
    %v1680 = vld [vmem:[%s6 + $0x60] sm:$0xff]
    %v1681 = vld [vmem:[%s6 + $0x68] sm:$0xff]
    %v1682 = vld [vmem:[%s6 + $0x70] sm:$0xff]
    %v1683 = vld [vmem:[%s6 + $0x78] sm:$0xff]
    %v1684 = vld [vmem:[%s7] sm:$0x1]
    %v1686 = vlaneseq
    %v1687 = vshrl.u32 %v1686, 7
    %v1688 = vsub.s32 0, %v1687
    %v1689 = vrot.slane %v1684, %v1688
    %1691 = vmatprep.subr.mxu0 0.0
    %1692 = vmatpush1.msra.mxu0 %v1668
    %1693 = vmatprep.subr.mxu0 0.0
    %1694 = vmatpush1.msra.mxu0 %v1669
    %1695 = vmatprep.subr.mxu0 0.0
    %1696 = vmatpush1.msra.mxu0 %v1670
    %1697 = vmatprep.subr.mxu0 0.0
    %1698 = vmatpush1.msra.mxu0 %v1671
    %1699 = vmatprep.subr.mxu0 0.0
    %1700 = vmatpush1.msra.mxu0 %v1672
    %1701 = vmatprep.subr.mxu0 0.0
    %1702 = vmatpush1.msra.mxu0 %v1673
    %1703 = vmatprep.subr.mxu0 0.0
    %1704 = vmatpush1.msra.mxu0 %v1674
    %1705 = vmatprep.subr.mxu0 0.0
    %1706 = vmatpush1.msra.mxu0 %v1675
    %1707 = vmatprep.subr.mxu0 0.0
    %1708 = vmatpush1.msra.mxu0 %v1676
    %1709 = vmatprep.subr.mxu0 0.0
    %1710 = vmatpush1.msra.mxu0 %v1677
    %1711 = vmatprep.subr.mxu0 0.0
    %1712 = vmatpush1.msra.mxu0 %v1678
    %1713 = vmatprep.subr.mxu0 0.0
    %1714 = vmatpush1.msra.mxu0 %v1679
    %1715 = vmatprep.subr.mxu0 0.0
    %1716 = vmatpush1.msra.mxu0 %v1680
    %1717 = vmatprep.subr.mxu0 0.0
    %1718 = vmatpush1.msra.mxu0 %v1681
    %1719 = vmatprep.subr.mxu0 0.0
    %1720 = vmatpush1.msra.mxu0 %v1682
    %1721 = vmatprep.subr.mxu0 0.0
    %1722 = vmatpush1.msra.mxu0 %v1683
    %1723 = vmatprep.subr.mxu0 0.0
    %1724 = vmatpush1.msra.mxu0 0.0
    %1725 = vmatprep.subr.mxu0 0.0
    %1726 = vmatpush1.msra.mxu0 0.0
    %1727 = vmatprep.subr.mxu0 0.0
    %1728 = vmatpush1.msra.mxu0 0.0
    %1729 = vmatprep.subr.mxu0 0.0
    %1730 = vmatpush1.msra.mxu0 0.0
    %1731 = vmatprep.subr.mxu0 0.0
    %1732 = vmatpush1.msra.mxu0 0.0
    %1733 = vmatprep.subr.mxu0 0.0
    %1734 = vmatpush1.msra.mxu0 0.0
    %1735 = vmatprep.subr.mxu0 0.0
    %1736 = vmatpush1.msra.mxu0 0.0
    %1737 = vmatprep.subr.mxu0 0.0
    %1738 = vmatpush1.msra.mxu0 0.0
    %1739 = vmatprep.subr.mxu0 0.0
    %1740 = vmatpush1.msra.mxu0 0.0
    %1741 = vmatprep.subr.mxu0 0.0
    %1742 = vmatpush1.msra.mxu0 0.0
    %1743 = vmatprep.subr.mxu0 0.0
    %1744 = vmatpush1.msra.mxu0 0.0
    %1745 = vmatprep.subr.mxu0 0.0
    %1746 = vmatpush1.msra.mxu0 0.0
    %1747 = vmatprep.subr.mxu0 0.0
    %1748 = vmatpush1.msra.mxu0 0.0
    %1749 = vmatprep.subr.mxu0 0.0
    %1750 = vmatpush1.msra.mxu0 0.0
    %1751 = vmatprep.subr.mxu0 0.0
    %1752 = vmatpush1.msra.mxu0 0.0
    %1753 = vmatprep.subr.mxu0 0.0
    %1754 = vmatpush1.msra.mxu0 0.0
    %1755 = vmatprep.mubr.f32.mxu0 0.0
    %1756 = vmatmul.mubr.f32.gmra.mrb[0].mxu0 %v1667
    %v1757 = vpop.f32.mrb[0].mxu0
    %v1758 = vadd.f32 %v1689, %v1757
    %v1759 = vpop.f32.mrb[0].mxu0
    %1760 = vdwg.mxu0
    %1761 = vst [vmem:[#allocation3] sm:$0xff] %v1758
    // Predicated region
    $region34: #{gru_rnn_forward.1} parent=1 // pred_check
      _
    $region35: #{gru_rnn_forward.1} parent=1 // pred_check_branch
      %1763 = sbr.rel (0) target = $region37
    $region36: #{gru_rnn_forward.1} parent=1 // pred_region
      %s1765 = ssub.s32 128, 128
      %1766 = vsyncadd [#allocation4], %s1765
      %s1768 = sshll.u32 [#allocation3], 4
      %s1769 = int_to_ptr.vmem [resolvable:$true] %s1768
      %1771 = dma.vmem_to_hbm [thread:$0]  %s1769, 128, %s8, [#allocation4]
    $region37: #{gru_rnn_forward.1} parent=1 // pred_fallthru
      _
    // Predicated region
    $region38: #{gru_rnn_forward.1} parent=1 // pred_check
      _
    $region39: #{gru_rnn_forward.1} parent=1 // pred_check_branch
      %1773 = sbr.rel (0) target = $region41
    $region40: #{gru_rnn_forward.1} parent=1 // pred_region
      %s1775 = ssub.s32 16, 16
      %1776 = vsyncadd [#allocation6], %s1775
      %s1778 = sshll.u32 [#allocation5], 4
      %s1779 = int_to_ptr.vmem [resolvable:$true] %s1778
      %1781 = dma.vmem_to_hbm [thread:$0]  %s1779, 16, %s9, [#allocation6]
    $region41: #{gru_rnn_forward.1} parent=1 // pred_fallthru
      _
    // Predicated region
    $region42: #{gru_rnn_forward.1} parent=1 // pred_check
      _
    $region43: #{gru_rnn_forward.1} parent=1 // pred_check_branch
      %1783 = sbr.rel (0) target = $region45
    $region44: #{gru_rnn_forward.1} parent=1 // pred_region
      %1784 = dma.done [#allocation4], 128
    $region45: #{gru_rnn_forward.1} parent=1 // pred_fallthru
      _
    // Predicated region
    $region46: #{gru_rnn_forward.1} parent=1 // pred_check
      _
    $region47: #{gru_rnn_forward.1} parent=1 // pred_check_branch
      %1786 = sbr.rel (0) target = $region49
    $region48: #{gru_rnn_forward.1} parent=1 // pred_region
      %1787 = dma.done [#allocation6], 16
    $region49: #{gru_rnn_forward.1} parent=1 // pred_fallthru
      _
    %1788 = vsyncpa [#allocation4], 1
    %1789 = vsyncpa [#allocation6], 1

</llo_original>
